<compile_context>
chip_gen: v7x
topology: tpu7x:2x2x1
jax: 0.10.0
libtpu: 0.0.40
codegen_flags: <defaults>
</compile_context>

<pallas_src>
import functools

import jax
import jax.numpy as jnp
from jax.experimental import pallas as pl
from jax.experimental.pallas import tpu as pltpu


def _round_up(x, m):
    return (x + m - 1) // m * m


# ---------------------------------------------------------------------------
# Kernel 1: fused conv-as-GEMM + bias + 2x2 max-pool + ReLU
# ---------------------------------------------------------------------------
def _conv_pool_relu_kernel(p0_ref, p1_ref, p2_ref, p3_ref, w_ref, b_ref, o_ref):
    """Each p?_ref holds im2col patches for one quadrant of every 2x2 pooling
    window; pooled row m = relu(max_q(P_q[m] @ W) + bias)."""
    w = w_ref[...]
    acc = jnp.dot(p0_ref[...], w, preferred_element_type=jnp.float32)
    for p_ref in (p1_ref, p2_ref, p3_ref):
        acc = jnp.maximum(
            acc, jnp.dot(p_ref[...], w, preferred_element_type=jnp.float32))
    o_ref[...] = jnp.maximum(acc + b_ref[...], 0.0).astype(o_ref.dtype)


def conv_pool_relu(patches, w, b, *, block_rows=512):
    """patches: 4 x [M, K*K*Cin] bf16 (one per pooling-window quadrant),
    w: [K*K*Cin, Cout] bf16, b: [Cout] f32.
    Returns relu(maxpool2x2(conv(x))) as [M, Cout] bf16 (rows = (b, ip, jp))."""
    M, KKC = patches[0].shape
    Cout = w.shape[1]

    tm = min(block_rows, _round_up(M, 8))      # <=512 rows: fits VMEM on v5e/v6e/v7x
    Mp = _round_up(M, tm)
    if Mp != M:
        patches = [jnp.pad(p, ((0, Mp - M), (0, 0))) for p in patches]

    p_spec = pl.BlockSpec((tm, KKC), lambda i: (i, 0))
    flops = 2 * 4 * Mp * KKC * Cout
    bytes_accessed = 4 * Mp * KKC * 2 + KKC * Cout * 2 + Cout * 4 + Mp * Cout * 2

    out = pl.pallas_call(
        _conv_pool_relu_kernel,
        grid=(Mp // tm,),
        out_shape=jax.ShapeDtypeStruct((Mp, Cout), jnp.bfloat16),
        in_specs=[p_spec, p_spec, p_spec, p_spec,
                  pl.BlockSpec((KKC, Cout), lambda i: (0, 0)),
                  pl.BlockSpec((1, Cout), lambda i: (0, 0))],
        out_specs=pl.BlockSpec((tm, Cout), lambda i: (i, 0)),
        compiler_params=pltpu.CompilerParams(
            dimension_semantics=("parallel",)),
        cost_estimate=pl.CostEstimate(
            flops=flops, transcendentals=0, bytes_accessed=bytes_accessed),
    )(*patches, w, b.reshape(1, Cout).astype(jnp.float32))
    return out[:M] if Mp != M else out


# ---------------------------------------------------------------------------
# Kernel 2: fused fc1 + ReLU + fc2 (the [B, 50] hidden never leaves VMEM)
# ---------------------------------------------------------------------------
def _mlp_head_kernel(f_ref, w1_ref, b1_ref, w2_ref, b2_ref, o_ref):
    h = jnp.dot(f_ref[...], w1_ref[...], preferred_element_type=jnp.float32)
    h = jnp.maximum(h + b1_ref[...], 0.0)
    # TODO(synk): F.dropout between fc1 and fc2 is identity (inference only).
    out = jnp.dot(h.astype(w2_ref.dtype), w2_ref[...],
                  preferred_element_type=jnp.float32)
    o_ref[...] = (out + b2_ref[...]).astype(o_ref.dtype)


def mlp_head(feat, w1, b1, w2, b2, *, block_rows=512):
    """feat: [B, 320] bf16, w1: [320, 50] bf16, w2: [50, 10] bf16. -> [B, 10] f32."""
    B, K1 = feat.shape
    H = w1.shape[1]
    N = w2.shape[1]

    tb = min(block_rows, _round_up(B, 8))
    Bp = _round_up(B, tb)
    if Bp != B:
        feat = jnp.pad(feat, ((0, Bp - B), (0, 0)))

    flops = 2 * Bp * (K1 * H + H * N)
    bytes_accessed = Bp * K1 * 2 + K1 * H * 2 + H * N * 2 + (H + N) * 4 + Bp * N * 4

    out = pl.pallas_call(
        _mlp_head_kernel,
        grid=(Bp // tb,),
        out_shape=jax.ShapeDtypeStruct((Bp, N), jnp.float32),
        in_specs=[pl.BlockSpec((tb, K1), lambda i: (i, 0)),
                  pl.BlockSpec((K1, H), lambda i: (0, 0)),
                  pl.BlockSpec((1, H), lambda i: (0, 0)),
                  pl.BlockSpec((H, N), lambda i: (0, 0)),
                  pl.BlockSpec((1, N), lambda i: (0, 0))],
        out_specs=pl.BlockSpec((tb, N), lambda i: (i, 0)),
        compiler_params=pltpu.CompilerParams(
            dimension_semantics=("parallel",)),
        cost_estimate=pl.CostEstimate(
            flops=flops, transcendentals=0, bytes_accessed=bytes_accessed),
    )(feat, w1, b1.reshape(1, H).astype(jnp.float32),
      w2, b2.reshape(1, N).astype(jnp.float32))
    return out[:B] if Bp != B else out


# --------------------------------- glue ------------------------------------
def im2col_pool_quadrants(x_nhwc, K):
    """For a KxK valid conv followed by 2x2/2 max-pool: returns four patch
    matrices P_q [B*Hp*Wp, K*K*C] (q = quadrant inside each pooling window),
    column order (di, dj, c), row order (b, ip, jp)."""
    B, H, W, C = x_nhwc.shape
    Ho, Wo = H - K + 1, W - K + 1
    Hp, Wp = Ho // 2, Wo // 2
    quads = []
    for a0 in (0, 1):
        for a1 in (0, 1):
            cols = []
            for di in range(K):
                for dj in range(K):
                    r0, c0 = a0 + di, a1 + dj
                    cols.append(x_nhwc[:, r0:r0 + 2 * Hp:2, c0:c0 + 2 * Wp:2, :])
            quads.append(
                jnp.concatenate(cols, axis=-1).reshape(B * Hp * Wp, K * K * C))
    return quads, Hp, Wp


# ------------------------------- parameters ---------------------------------
def init_params(key):
    """PyTorch-layout parameters, uniform(-1/sqrt(fan_in), 1/sqrt(fan_in))."""
    k = jax.random.split(key, 8)

    def u(kk, shape, fan_in):
        bound = 1.0 / jnp.sqrt(jnp.float32(fan_in))
        return jax.random.uniform(kk, shape, jnp.float32, -bound, bound)

    return dict(
        conv1_w=u(k[0], (10, 1, 5, 5), 1 * 5 * 5),
        conv1_b=u(k[1], (10,), 1 * 5 * 5),
        conv2_w=u(k[2], (20, 10, 5, 5), 10 * 5 * 5),
        conv2_b=u(k[3], (20,), 10 * 5 * 5),
        fc1_w=u(k[4], (50, 320), 320),
        fc1_b=u(k[5], (50,), 320),
        fc2_w=u(k[6], (10, 50), 50),
        fc2_b=u(k[7], (10,), 50),
    )


def prepare_params(p):
    """One-time relayout of PyTorch weights into the kernel layout:
    conv w -> [K*K*Cin, Cout] with row order (di, dj, c); fc w -> [in, out];
    the NCHW view(-1, 320) flatten permutation is folded into fc1's rows so
    the conv2 output stays in NHWC-flattened order; MXU inputs are bf16."""
    c1 = jnp.transpose(p["conv1_w"], (2, 3, 1, 0)).reshape(25, 10)
    c2 = jnp.transpose(p["conv2_w"], (2, 3, 1, 0)).reshape(250, 20)
    f1 = jnp.transpose(p["fc1_w"].reshape(50, 20, 4, 4),
                       (2, 3, 1, 0)).reshape(320, 50)   # rows (ip, jp, co)
    f2 = p["fc2_w"].T                                   # [50, 10]
    return dict(
        conv1_w=c1.astype(jnp.bfloat16), conv1_b=p["conv1_b"],
        conv2_w=c2.astype(jnp.bfloat16), conv2_b=p["conv2_b"],
        fc1_w=f1.astype(jnp.bfloat16), fc1_b=p["fc1_b"],
        fc2_w=f2.astype(jnp.bfloat16), fc2_b=p["fc2_b"],
    )


# -------------------------------- forward -----------------------------------
def convneta_forward(params, x_nchw):
    """ConvNeta forward pass (inference). x_nchw: [B, 1, 28, 28] float32."""
    B = x_nchw.shape[0]
    # NCHW -> NHWC, cast once to bf16 so all downstream DMA/MXU traffic is 16-bit.
    x = jnp.transpose(x_nchw, (0, 2, 3, 1)).astype(jnp.bfloat16)

    # conv1 (1 -> 10, k=5) + maxpool2 + relu, fused in a single kernel.
    q1, H1p, W1p = im2col_pool_quadrants(x, 5)                       # 4 x [B*144, 25]
    y1 = conv_pool_relu(q1, params["conv1_w"], params["conv1_b"])    # [B*144, 10] bf16

    # conv2 (10 -> 20, k=5) + maxpool2 + relu.  Dropout2d is identity in eval.
    # TODO(synk): training-mode Dropout2d / F.dropout not implemented (inference only).
    x2 = y1.reshape(B, H1p, W1p, 10)                                 # [B, 12, 12, 10]
    q2, H2p, W2p = im2col_pool_quadrants(x2, 5)                      # 4 x [B*16, 250]
    y2 = conv_pool_relu(q2, params["conv2_w"], params["conv2_b"])    # [B*16, 20] bf16

    # Flatten stays NHWC (the NCHW view(-1, 320) permutation lives in fc1_w),
    # then fused fc1 + relu + (dropout=identity) + fc2.
    feat = y2.reshape(B, H2p * W2p * 20)                             # [B, 320]
    return mlp_head(feat, params["fc1_w"], params["fc1_b"],
                    params["fc2_w"], params["fc2_b"])                # [B, 10] f32


if __name__ == "__main__":
    key = jax.random.PRNGKey(0)
    pkey, xkey = jax.random.split(key)
    params = prepare_params(init_params(pkey))
    # Input spatial size 28x28 is implied by fc1 (320 = 20 * 4 * 4).
    x = jax.random.normal(xkey, (2, 1, 28, 28), jnp.float32)

    fwd = jax.jit(functools.partial(convneta_forward, params))
    out = jax.block_until_ready(fwd(x))
    assert out.shape == (2, 10) and out.dtype == jnp.float32
    print("KERNEL_OK")
</pallas_src>

<mosaic_0001>
module attributes {stable_mosaic.version = 11 : i64} {
  func.func @_conv_pool_relu_kernel(%arg0: i32, %arg1: memref<288x25xbf16, #tpu.memory_space<vmem>>, %arg2: memref<288x25xbf16, #tpu.memory_space<vmem>>, %arg3: memref<288x25xbf16, #tpu.memory_space<vmem>>, %arg4: memref<288x25xbf16, #tpu.memory_space<vmem>>, %arg5: memref<25x10xbf16, #tpu.memory_space<vmem>>, %arg6: memref<1x10xf32, #tpu.memory_space<vmem>>, %arg7: memref<288x10xbf16, #tpu.memory_space<vmem>>) attributes {dimension_semantics = [#tpu.dimension_semantics<parallel>], iteration_bounds = array<i64: 1>, scalar_prefetch = 0 : i64, scratch_operands = 0 : i64, tpu.core_type = #tpu.core_type<tc>, window_params = [{transform_indices = @transform_0, window_bounds = array<i64: 288, 25>}, {transform_indices = @transform_1, window_bounds = array<i64: 288, 25>}, {transform_indices = @transform_2, window_bounds = array<i64: 288, 25>}, {transform_indices = @transform_3, window_bounds = array<i64: 288, 25>}, {pipeline_mode = #tpu.pipeline_mode<synchronous>, transform_indices = @transform_4, window_bounds = array<i64: 25, 10>}, {pipeline_mode = #tpu.pipeline_mode<synchronous>, transform_indices = @transform_5, window_bounds = array<i64: 1, 10>}, {transform_indices = @transform_6, window_bounds = array<i64: 288, 10>}]} {
    %c0 = arith.constant 0 : index
    %c0_0 = arith.constant 0 : index
    %0 = vector.load %arg5[%c0, %c0_0] : memref<25x10xbf16, #tpu.memory_space<vmem>>, vector<25x10xbf16>
    %c0_1 = arith.constant 0 : index
    %c0_2 = arith.constant 0 : index
    %1 = vector.load %arg1[%c0_1, %c0_2] : memref<288x25xbf16, #tpu.memory_space<vmem>>, vector<288x25xbf16>
    %cst = arith.constant dense<0.000000e+00> : vector<288x10xf32>
    %2 = tpu.matmul %1, %0, %cst {dimension_numbers = #tpu.dot_dimension_numbers<[1], [0], [0], [1], [0, 0, 1, 1], [], []>} : vector<288x25xbf16>, vector<25x10xbf16>, vector<288x10xf32> -> vector<288x10xf32>
    %c0_3 = arith.constant 0 : index
    %c0_4 = arith.constant 0 : index
    %3 = vector.load %arg2[%c0_3, %c0_4] : memref<288x25xbf16, #tpu.memory_space<vmem>>, vector<288x25xbf16>
    %cst_5 = arith.constant dense<0.000000e+00> : vector<288x10xf32>
    %4 = tpu.matmul %3, %0, %cst_5 {dimension_numbers = #tpu.dot_dimension_numbers<[1], [0], [0], [1], [0, 0, 1, 1], [], []>} : vector<288x25xbf16>, vector<25x10xbf16>, vector<288x10xf32> -> vector<288x10xf32>
    %5 = arith.maximumf %2, %4 : vector<288x10xf32>
    %c0_6 = arith.constant 0 : index
    %c0_7 = arith.constant 0 : index
    %6 = vector.load %arg3[%c0_6, %c0_7] : memref<288x25xbf16, #tpu.memory_space<vmem>>, vector<288x25xbf16>
    %cst_8 = arith.constant dense<0.000000e+00> : vector<288x10xf32>
    %7 = tpu.matmul %6, %0, %cst_8 {dimension_numbers = #tpu.dot_dimension_numbers<[1], [0], [0], [1], [0, 0, 1, 1], [], []>} : vector<288x25xbf16>, vector<25x10xbf16>, vector<288x10xf32> -> vector<288x10xf32>
    %8 = arith.maximumf %5, %7 : vector<288x10xf32>
    %c0_9 = arith.constant 0 : index
    %c0_10 = arith.constant 0 : index
    %9 = vector.load %arg4[%c0_9, %c0_10] : memref<288x25xbf16, #tpu.memory_space<vmem>>, vector<288x25xbf16>
    %cst_11 = arith.constant dense<0.000000e+00> : vector<288x10xf32>
    %10 = tpu.matmul %9, %0, %cst_11 {dimension_numbers = #tpu.dot_dimension_numbers<[1], [0], [0], [1], [0, 0, 1, 1], [], []>} : vector<288x25xbf16>, vector<25x10xbf16>, vector<288x10xf32> -> vector<288x10xf32>
    %11 = arith.maximumf %8, %10 : vector<288x10xf32>
    %c0_12 = arith.constant 0 : index
    %c0_13 = arith.constant 0 : index
    %12 = vector.load %arg6[%c0_12, %c0_13] : memref<1x10xf32, #tpu.memory_space<vmem>>, vector<1x10xf32>
    %13 = vector.broadcast %12 : vector<1x10xf32> to vector<288x10xf32>
    %14 = arith.addf %11, %13 : vector<288x10xf32>
    %cst_14 = arith.constant 0.000000e+00 : f32
    %15 = vector.broadcast %cst_14 : f32 to vector<288x10xf32>
    %16 = arith.maximumf %14, %15 : vector<288x10xf32>
    %17 = arith.truncf %16 : vector<288x10xf32> to vector<288x10xbf16>
    %c0_15 = arith.constant 0 : index
    %c0_16 = arith.constant 0 : index
    %18 = vector.load %arg7[%c0_15, %c0_16] : memref<288x10xbf16, #tpu.memory_space<vmem>>, vector<288x10xbf16>
    tpu.vector_store %arg7[%c0_15, %c0_16], %17 {strides = array<i32>} : memref<288x10xbf16, #tpu.memory_space<vmem>>, vector<288x10xbf16>,
    return
  }
  func.func @transform_0(%arg0: i32) -> (i32, i32) {
    %c0_i32 = arith.constant 0 : i32
    %c0_i32_0 = arith.constant 0 : i32
    return %arg0, %c0_i32 : i32, i32
  }
  func.func @transform_1(%arg0: i32) -> (i32, i32) {
    %c0_i32 = arith.constant 0 : i32
    %c0_i32_0 = arith.constant 0 : i32
    return %arg0, %c0_i32 : i32, i32
  }
  func.func @transform_2(%arg0: i32) -> (i32, i32) {
    %c0_i32 = arith.constant 0 : i32
    %c0_i32_0 = arith.constant 0 : i32
    return %arg0, %c0_i32 : i32, i32
  }
  func.func @transform_3(%arg0: i32) -> (i32, i32) {
    %c0_i32 = arith.constant 0 : i32
    %c0_i32_0 = arith.constant 0 : i32
    return %arg0, %c0_i32 : i32, i32
  }
  func.func @transform_4(%arg0: i32) -> (i32, i32) {
    %c0_i32 = arith.constant 0 : i32
    %c0_i32_0 = arith.constant 0 : i32
    %c0_i32_1 = arith.constant 0 : i32
    return %c0_i32, %c0_i32_0 : i32, i32
  }
  func.func @transform_5(%arg0: i32) -> (i32, i32) {
    %c0_i32 = arith.constant 0 : i32
    %c0_i32_0 = arith.constant 0 : i32
    %c0_i32_1 = arith.constant 0 : i32
    return %c0_i32, %c0_i32_0 : i32, i32
  }
  func.func @transform_6(%arg0: i32) -> (i32, i32) {
    %c0_i32 = arith.constant 0 : i32
    %c0_i32_0 = arith.constant 0 : i32
    return %arg0, %c0_i32 : i32, i32
  }
}

module attributes {stable_mosaic.version = 11 : i64} {
  func.func @_conv_pool_relu_kernel(%arg0: i32, %arg1: memref<32x250xbf16, #tpu.memory_space<vmem>>, %arg2: memref<32x250xbf16, #tpu.memory_space<vmem>>, %arg3: memref<32x250xbf16, #tpu.memory_space<vmem>>, %arg4: memref<32x250xbf16, #tpu.memory_space<vmem>>, %arg5: memref<250x20xbf16, #tpu.memory_space<vmem>>, %arg6: memref<1x20xf32, #tpu.memory_space<vmem>>, %arg7: memref<32x20xbf16, #tpu.memory_space<vmem>>) attributes {dimension_semantics = [#tpu.dimension_semantics<parallel>], iteration_bounds = array<i64: 1>, scalar_prefetch = 0 : i64, scratch_operands = 0 : i64, tpu.core_type = #tpu.core_type<tc>, window_params = [{transform_indices = @transform_0, window_bounds = array<i64: 32, 250>}, {transform_indices = @transform_1, window_bounds = array<i64: 32, 250>}, {transform_indices = @transform_2, window_bounds = array<i64: 32, 250>}, {transform_indices = @transform_3, window_bounds = array<i64: 32, 250>}, {pipeline_mode = #tpu.pipeline_mode<synchronous>, transform_indices = @transform_4, window_bounds = array<i64: 250, 20>}, {pipeline_mode = #tpu.pipeline_mode<synchronous>, transform_indices = @transform_5, window_bounds = array<i64: 1, 20>}, {transform_indices = @transform_6, window_bounds = array<i64: 32, 20>}]} {
    %c0 = arith.constant 0 : index
    %c0_0 = arith.constant 0 : index
    %0 = vector.load %arg5[%c0, %c0_0] : memref<250x20xbf16, #tpu.memory_space<vmem>>, vector<250x20xbf16>
    %c0_1 = arith.constant 0 : index
    %c0_2 = arith.constant 0 : index
    %1 = vector.load %arg1[%c0_1, %c0_2] : memref<32x250xbf16, #tpu.memory_space<vmem>>, vector<32x250xbf16>
    %cst = arith.constant dense<0.000000e+00> : vector<32x20xf32>
    %2 = tpu.matmul %1, %0, %cst {dimension_numbers = #tpu.dot_dimension_numbers<[1], [0], [0], [1], [0, 0, 1, 1], [], []>} : vector<32x250xbf16>, vector<250x20xbf16>, vector<32x20xf32> -> vector<32x20xf32>
    %c0_3 = arith.constant 0 : index
    %c0_4 = arith.constant 0 : index
    %3 = vector.load %arg2[%c0_3, %c0_4] : memref<32x250xbf16, #tpu.memory_space<vmem>>, vector<32x250xbf16>
    %cst_5 = arith.constant dense<0.000000e+00> : vector<32x20xf32>
    %4 = tpu.matmul %3, %0, %cst_5 {dimension_numbers = #tpu.dot_dimension_numbers<[1], [0], [0], [1], [0, 0, 1, 1], [], []>} : vector<32x250xbf16>, vector<250x20xbf16>, vector<32x20xf32> -> vector<32x20xf32>
    %5 = arith.maximumf %2, %4 : vector<32x20xf32>
    %c0_6 = arith.constant 0 : index
    %c0_7 = arith.constant 0 : index
    %6 = vector.load %arg3[%c0_6, %c0_7] : memref<32x250xbf16, #tpu.memory_space<vmem>>, vector<32x250xbf16>
    %cst_8 = arith.constant dense<0.000000e+00> : vector<32x20xf32>
    %7 = tpu.matmul %6, %0, %cst_8 {dimension_numbers = #tpu.dot_dimension_numbers<[1], [0], [0], [1], [0, 0, 1, 1], [], []>} : vector<32x250xbf16>, vector<250x20xbf16>, vector<32x20xf32> -> vector<32x20xf32>
    %8 = arith.maximumf %5, %7 : vector<32x20xf32>
    %c0_9 = arith.constant 0 : index
    %c0_10 = arith.constant 0 : index
    %9 = vector.load %arg4[%c0_9, %c0_10] : memref<32x250xbf16, #tpu.memory_space<vmem>>, vector<32x250xbf16>
    %cst_11 = arith.constant dense<0.000000e+00> : vector<32x20xf32>
    %10 = tpu.matmul %9, %0, %cst_11 {dimension_numbers = #tpu.dot_dimension_numbers<[1], [0], [0], [1], [0, 0, 1, 1], [], []>} : vector<32x250xbf16>, vector<250x20xbf16>, vector<32x20xf32> -> vector<32x20xf32>
    %11 = arith.maximumf %8, %10 : vector<32x20xf32>
    %c0_12 = arith.constant 0 : index
    %c0_13 = arith.constant 0 : index
    %12 = vector.load %arg6[%c0_12, %c0_13] : memref<1x20xf32, #tpu.memory_space<vmem>>, vector<1x20xf32>
    %13 = vector.broadcast %12 : vector<1x20xf32> to vector<32x20xf32>
    %14 = arith.addf %11, %13 : vector<32x20xf32>
    %cst_14 = arith.constant 0.000000e+00 : f32
    %15 = vector.broadcast %cst_14 : f32 to vector<32x20xf32>
    %16 = arith.maximumf %14, %15 : vector<32x20xf32>
    %17 = arith.truncf %16 : vector<32x20xf32> to vector<32x20xbf16>
    %c0_15 = arith.constant 0 : index
    %c0_16 = arith.constant 0 : index
    %18 = vector.load %arg7[%c0_15, %c0_16] : memref<32x20xbf16, #tpu.memory_space<vmem>>, vector<32x20xbf16>
    tpu.vector_store %arg7[%c0_15, %c0_16], %17 {strides = array<i32>} : memref<32x20xbf16, #tpu.memory_space<vmem>>, vector<32x20xbf16>,
    return
  }
  func.func @transform_0(%arg0: i32) -> (i32, i32) {
    %c0_i32 = arith.constant 0 : i32
    %c0_i32_0 = arith.constant 0 : i32
    return %arg0, %c0_i32 : i32, i32
  }
  func.func @transform_1(%arg0: i32) -> (i32, i32) {
    %c0_i32 = arith.constant 0 : i32
    %c0_i32_0 = arith.constant 0 : i32
    return %arg0, %c0_i32 : i32, i32
  }
  func.func @transform_2(%arg0: i32) -> (i32, i32) {
    %c0_i32 = arith.constant 0 : i32
    %c0_i32_0 = arith.constant 0 : i32
    return %arg0, %c0_i32 : i32, i32
  }
  func.func @transform_3(%arg0: i32) -> (i32, i32) {
    %c0_i32 = arith.constant 0 : i32
    %c0_i32_0 = arith.constant 0 : i32
    return %arg0, %c0_i32 : i32, i32
  }
  func.func @transform_4(%arg0: i32) -> (i32, i32) {
    %c0_i32 = arith.constant 0 : i32
    %c0_i32_0 = arith.constant 0 : i32
    %c0_i32_1 = arith.constant 0 : i32
    return %c0_i32, %c0_i32_0 : i32, i32
  }
  func.func @transform_5(%arg0: i32) -> (i32, i32) {
    %c0_i32 = arith.constant 0 : i32
    %c0_i32_0 = arith.constant 0 : i32
    %c0_i32_1 = arith.constant 0 : i32
    return %c0_i32, %c0_i32_0 : i32, i32
  }
  func.func @transform_6(%arg0: i32) -> (i32, i32) {
    %c0_i32 = arith.constant 0 : i32
    %c0_i32_0 = arith.constant 0 : i32
    return %arg0, %c0_i32 : i32, i32
  }
}

module attributes {stable_mosaic.version = 11 : i64} {
  func.func @_mlp_head_kernel(%arg0: i32, %arg1: memref<8x320xbf16, #tpu.memory_space<vmem>>, %arg2: memref<320x50xbf16, #tpu.memory_space<vmem>>, %arg3: memref<1x50xf32, #tpu.memory_space<vmem>>, %arg4: memref<50x10xbf16, #tpu.memory_space<vmem>>, %arg5: memref<1x10xf32, #tpu.memory_space<vmem>>, %arg6: memref<8x10xf32, #tpu.memory_space<vmem>>) attributes {dimension_semantics = [#tpu.dimension_semantics<parallel>], iteration_bounds = array<i64: 1>, scalar_prefetch = 0 : i64, scratch_operands = 0 : i64, tpu.core_type = #tpu.core_type<tc>, window_params = [{transform_indices = @transform_0, window_bounds = array<i64: 8, 320>}, {pipeline_mode = #tpu.pipeline_mode<synchronous>, transform_indices = @transform_1, window_bounds = array<i64: 320, 50>}, {pipeline_mode = #tpu.pipeline_mode<synchronous>, transform_indices = @transform_2, window_bounds = array<i64: 1, 50>}, {pipeline_mode = #tpu.pipeline_mode<synchronous>, transform_indices = @transform_3, window_bounds = array<i64: 50, 10>}, {pipeline_mode = #tpu.pipeline_mode<synchronous>, transform_indices = @transform_4, window_bounds = array<i64: 1, 10>}, {transform_indices = @transform_5, window_bounds = array<i64: 8, 10>}]} {
    %c0 = arith.constant 0 : index
    %c0_0 = arith.constant 0 : index
    %0 = vector.load %arg1[%c0, %c0_0] : memref<8x320xbf16, #tpu.memory_space<vmem>>, vector<8x320xbf16>
    %c0_1 = arith.constant 0 : index
    %c0_2 = arith.constant 0 : index
    %1 = vector.load %arg2[%c0_1, %c0_2] : memref<320x50xbf16, #tpu.memory_space<vmem>>, vector<320x50xbf16>
    %cst = arith.constant dense<0.000000e+00> : vector<8x50xf32>
    %2 = tpu.matmul %0, %1, %cst {dimension_numbers = #tpu.dot_dimension_numbers<[1], [0], [0], [1], [0, 0, 1, 1], [], []>} : vector<8x320xbf16>, vector<320x50xbf16>, vector<8x50xf32> -> vector<8x50xf32>
    %c0_3 = arith.constant 0 : index
    %c0_4 = arith.constant 0 : index
    %3 = vector.load %arg3[%c0_3, %c0_4] : memref<1x50xf32, #tpu.memory_space<vmem>>, vector<1x50xf32>
    %4 = vector.broadcast %3 : vector<1x50xf32> to vector<8x50xf32>
    %5 = arith.addf %2, %4 : vector<8x50xf32>
    %cst_5 = arith.constant 0.000000e+00 : f32
    %6 = vector.broadcast %cst_5 : f32 to vector<8x50xf32>
    %7 = arith.maximumf %5, %6 : vector<8x50xf32>
    %8 = arith.truncf %7 : vector<8x50xf32> to vector<8x50xbf16>
    %c0_6 = arith.constant 0 : index
    %c0_7 = arith.constant 0 : index
    %9 = vector.load %arg4[%c0_6, %c0_7] : memref<50x10xbf16, #tpu.memory_space<vmem>>, vector<50x10xbf16>
    %cst_8 = arith.constant dense<0.000000e+00> : vector<8x10xf32>
    %10 = tpu.matmul %8, %9, %cst_8 {dimension_numbers = #tpu.dot_dimension_numbers<[1], [0], [0], [1], [0, 0, 1, 1], [], []>} : vector<8x50xbf16>, vector<50x10xbf16>, vector<8x10xf32> -> vector<8x10xf32>
    %c0_9 = arith.constant 0 : index
    %c0_10 = arith.constant 0 : index
    %11 = vector.load %arg5[%c0_9, %c0_10] : memref<1x10xf32, #tpu.memory_space<vmem>>, vector<1x10xf32>
    %12 = vector.broadcast %11 : vector<1x10xf32> to vector<8x10xf32>
    %13 = arith.addf %10, %12 : vector<8x10xf32>
    %c0_11 = arith.constant 0 : index
    %c0_12 = arith.constant 0 : index
    %14 = vector.load %arg6[%c0_11, %c0_12] : memref<8x10xf32, #tpu.memory_space<vmem>>, vector<8x10xf32>
    tpu.vector_store %arg6[%c0_11, %c0_12], %13 {strides = array<i32>} : memref<8x10xf32, #tpu.memory_space<vmem>>, vector<8x10xf32>,
    return
  }
  func.func @transform_0(%arg0: i32) -> (i32, i32) {
    %c0_i32 = arith.constant 0 : i32
    %c0_i32_0 = arith.constant 0 : i32
    return %arg0, %c0_i32 : i32, i32
  }
  func.func @transform_1(%arg0: i32) -> (i32, i32) {
    %c0_i32 = arith.constant 0 : i32
    %c0_i32_0 = arith.constant 0 : i32
    %c0_i32_1 = arith.constant 0 : i32
    return %c0_i32, %c0_i32_0 : i32, i32
  }
  func.func @transform_2(%arg0: i32) -> (i32, i32) {
    %c0_i32 = arith.constant 0 : i32
    %c0_i32_0 = arith.constant 0 : i32
    %c0_i32_1 = arith.constant 0 : i32
    return %c0_i32, %c0_i32_0 : i32, i32
  }
  func.func @transform_3(%arg0: i32) -> (i32, i32) {
    %c0_i32 = arith.constant 0 : i32
    %c0_i32_0 = arith.constant 0 : i32
    %c0_i32_1 = arith.constant 0 : i32
    return %c0_i32, %c0_i32_0 : i32, i32
  }
  func.func @transform_4(%arg0: i32) -> (i32, i32) {
    %c0_i32 = arith.constant 0 : i32
    %c0_i32_0 = arith.constant 0 : i32
    %c0_i32_1 = arith.constant 0 : i32
    return %c0_i32, %c0_i32_0 : i32, i32
  }
  func.func @transform_5(%arg0: i32) -> (i32, i32) {
    %c0_i32 = arith.constant 0 : i32
    %c0_i32_0 = arith.constant 0 : i32
    return %arg0, %c0_i32 : i32, i32
  }
}

</mosaic_0001>

<llo_original>
// kernel: convneta_forward.3
$region0: #{convneta_forward.3}
  #allocation0 [shape = 'u32[]', space=smem, size = 0x4, offset = 0x4, fixed_abs, tag = 'smem constant byte address 0x4 - core index']
  #allocation1 [shape = 'u32[144,128]{1,0:T(1,128)}', space=vmem, size = 0x12000, scoped, tag = 'internal scratch']
  %s0 = inlined_call_operand.vmem [shape: bf16[288,25], index: 0, kind: input, shape index: {}]
  %s1 = inlined_call_operand.vmem [shape: bf16[288,25], index: 1, kind: input, shape index: {}]
  %s2 = inlined_call_operand.vmem [shape: bf16[288,25], index: 2, kind: input, shape index: {}]
  %s3 = inlined_call_operand.vmem [shape: bf16[288,25], index: 3, kind: input, shape index: {}]
  %s4 = inlined_call_operand.vmem [shape: bf16[25,10], index: 4, kind: input, shape index: {}]
  %s5 = inlined_call_operand.vmem [shape: f32[1,10], index: 5, kind: input, shape index: {}]
  %s6 = inlined_call_operand.vmem [shape: bf16[288,10], index: 6, kind: output, shape index: {}]
  %s7 = sld [smem:[#allocation0]]
  $region34: #{convneta_forward.3} parent=0
    _
  %s9 = ssub.s32 1, %s7
  %s10 = scalar_select 0, %s9, %s7
  // Predicated region
  $region2: #{convneta_forward.3} parent=0 // pred_check
    _
  $region3: #{convneta_forward.3} parent=0 // pred_check_branch
    %12 = sbr.rel (0) target = $region5
  $region4: #{convneta_forward.3} parent=0 // pred_region
    _
  $region5: #{convneta_forward.3} parent=0 // pred_fallthru
    _
  // Predicated region
  $region6: #{convneta_forward.3} parent=0 // pred_check
    _
  $region7: #{convneta_forward.3} parent=0 // pred_check_branch
    %14 = sbr.rel (0) target = $region9
  $region8: #{convneta_forward.3} parent=0 // pred_region
    _
  $region9: #{convneta_forward.3} parent=0 // pred_fallthru
    _
  // Predicated region
  $region10: #{convneta_forward.3} parent=0 // pred_check
    _
  $region11: #{convneta_forward.3} parent=0 // pred_check_branch
    %16 = sbr.rel (0) target = $region13
  $region12: #{convneta_forward.3} parent=0 // pred_region
    _
  $region13: #{convneta_forward.3} parent=0 // pred_fallthru
    _
  // Predicated region
  $region14: #{convneta_forward.3} parent=0 // pred_check
    _
  $region15: #{convneta_forward.3} parent=0 // pred_check_branch
    %18 = sbr.rel (0) target = $region17
  $region16: #{convneta_forward.3} parent=0 // pred_region
    _
  $region17: #{convneta_forward.3} parent=0 // pred_fallthru
    _
  // Predicated region
  $region18: #{convneta_forward.3} parent=0 // pred_check
    _
  $region19: #{convneta_forward.3} parent=0 // pred_check_branch
    %20 = sbr.rel (0) target = $region21
  $region20: #{convneta_forward.3} parent=0 // pred_region
    _
  $region21: #{convneta_forward.3} parent=0 // pred_fallthru
    _
  // Predicated region
  $region22: #{convneta_forward.3} parent=0 // pred_check
    _
  $region23: #{convneta_forward.3} parent=0 // pred_check_branch
    %22 = sbr.rel (0) target = $region25
  $region24: #{convneta_forward.3} parent=0 // pred_region
    _
  $region25: #{convneta_forward.3} parent=0 // pred_fallthru
    _
  %v24 = vld [vmem:[%s4] sm:$0xf]
  %v25 = vld [vmem:[%s4 + $0x4] sm:$0xf]
  %v26 = vld [vmem:[%s4 + $0x8] sm:$0xf]
  %v27 = vld [vmem:[%s4 + $0xc] sm:$0x1]
  %v28 = vld [vmem:[%s0] sm:$0xf]
  %v29 = vld [vmem:[%s0 + $0x4] sm:$0xf]
  %v30 = vld [vmem:[%s0 + $0x8] sm:$0xf]
  %v31 = vld [vmem:[%s0 + $0xc] sm:$0xf]
  %v32 = vld [vmem:[%s0 + $0x10] sm:$0xf]
  %v33 = vld [vmem:[%s0 + $0x14] sm:$0xf]
  %v34 = vld [vmem:[%s0 + $0x18] sm:$0xf]
  %v35 = vld [vmem:[%s0 + $0x1c] sm:$0xf]
  %v36 = vld [vmem:[%s0 + $0x20] sm:$0xf]
  %v37 = vld [vmem:[%s0 + $0x24] sm:$0xf]
  %v38 = vld [vmem:[%s0 + $0x28] sm:$0xf]
  %v39 = vld [vmem:[%s0 + $0x2c] sm:$0xf]
  %v40 = vld [vmem:[%s0 + $0x30] sm:$0xf]
  %v41 = vld [vmem:[%s0 + $0x34] sm:$0xf]
  %v42 = vld [vmem:[%s0 + $0x38] sm:$0xf]
  %v43 = vld [vmem:[%s0 + $0x3c] sm:$0xf]
  %v44 = vld [vmem:[%s0 + $0x40] sm:$0xf]
  %v45 = vld [vmem:[%s0 + $0x44] sm:$0xf]
  %v46 = vld [vmem:[%s0 + $0x48] sm:$0xf]
  %v47 = vld [vmem:[%s0 + $0x4c] sm:$0xf]
  %v48 = vld [vmem:[%s0 + $0x50] sm:$0xf]
  %v49 = vld [vmem:[%s0 + $0x54] sm:$0xf]
  %v50 = vld [vmem:[%s0 + $0x58] sm:$0xf]
  %v51 = vld [vmem:[%s0 + $0x5c] sm:$0xf]
  %v52 = vld [vmem:[%s0 + $0x60] sm:$0xf]
  %v53 = vld [vmem:[%s0 + $0x64] sm:$0xf]
  %v54 = vld [vmem:[%s0 + $0x68] sm:$0xf]
  %v55 = vld [vmem:[%s0 + $0x6c] sm:$0xf]
  %v56 = vld [vmem:[%s0 + $0x70] sm:$0xf]
  %v57 = vld [vmem:[%s0 + $0x74] sm:$0xf]
  %v58 = vld [vmem:[%s0 + $0x78] sm:$0xf]
  %v59 = vld [vmem:[%s0 + $0x7c] sm:$0xf]
  %v60 = vld [vmem:[%s0 + $0x80] sm:$0xf]
  %v61 = vld [vmem:[%s0 + $0x84] sm:$0xf]
  %v62 = vld [vmem:[%s0 + $0x88] sm:$0xf]
  %v63 = vld [vmem:[%s0 + $0x8c] sm:$0xf]
  %v100 = vunpack.c.l.b16 %v28
  %v101 = vunpack.c.l.b16 %v29
  %v102 = vunpack.c.l.b16 %v30
  %v103 = vunpack.c.l.b16 %v31
  %v104 = vunpack.c.l.b16 %v32
  %v105 = vunpack.c.l.b16 %v33
  %v106 = vunpack.c.l.b16 %v34
  %v107 = vunpack.c.l.b16 %v35
  %v108 = vunpack.c.l.b16 %v36
  %v109 = vunpack.c.l.b16 %v37
  %v110 = vunpack.c.l.b16 %v38
  %v111 = vunpack.c.l.b16 %v39
  %v112 = vunpack.c.l.b16 %v40
  %v113 = vunpack.c.l.b16 %v41
  %v114 = vunpack.c.l.b16 %v42
  %v115 = vunpack.c.l.b16 %v43
  %v116 = vunpack.c.l.b16 %v44
  %v117 = vunpack.c.l.b16 %v45
  %v118 = vunpack.c.l.b16 %v46
  %v119 = vunpack.c.l.b16 %v47
  %v120 = vunpack.c.l.b16 %v48
  %v121 = vunpack.c.l.b16 %v49
  %v122 = vunpack.c.l.b16 %v50
  %v123 = vunpack.c.l.b16 %v51
  %v124 = vunpack.c.l.b16 %v52
  %v125 = vunpack.c.l.b16 %v53
  %v126 = vunpack.c.l.b16 %v54
  %v127 = vunpack.c.l.b16 %v55
  %v128 = vunpack.c.l.b16 %v56
  %v129 = vunpack.c.l.b16 %v57
  %v130 = vunpack.c.l.b16 %v58
  %v131 = vunpack.c.l.b16 %v59
  %v132 = vunpack.c.l.b16 %v60
  %v133 = vunpack.c.l.b16 %v61
  %v134 = vunpack.c.l.b16 %v62
  %v135 = vunpack.c.l.b16 %v63
  %v136 = vpack.c.b16 %v101, %v100
  %v137 = vpack.c.b16 %v103, %v102
  %v138 = vpack.c.b16 %v105, %v104
  %v139 = vpack.c.b16 %v107, %v106
  %v140 = vpack.c.b16 %v109, %v108
  %v141 = vpack.c.b16 %v111, %v110
  %v142 = vpack.c.b16 %v113, %v112
  %v143 = vpack.c.b16 %v115, %v114
  %v144 = vpack.c.b16 %v117, %v116
  %v145 = vpack.c.b16 %v119, %v118
  %v146 = vpack.c.b16 %v121, %v120
  %v147 = vpack.c.b16 %v123, %v122
  %v148 = vpack.c.b16 %v125, %v124
  %v149 = vpack.c.b16 %v127, %v126
  %v150 = vpack.c.b16 %v129, %v128
  %v151 = vpack.c.b16 %v131, %v130
  %v152 = vpack.c.b16 %v133, %v132
  %v153 = vpack.c.b16 %v135, %v134
  %v158 = vunpack.c.l.b16 %v24
  %v159 = vunpack.c.l.b16 %v25
  %v160 = vunpack.c.l.b16 %v26
  %v161 = vunpack.c.l.b16 %v27
  %v162 = vpack.c.b16 %v159, %v158
  %v163 = vpack.c.b16 %v161, %v160
  %vm165 = vcmask 203776
  %v167 = vsel %vm165, %v136, 0
  %v170 = vsel %vm165, %v137, 0
  %v173 = vsel %vm165, %v138, 0
  %v176 = vsel %vm165, %v139, 0
  %v179 = vsel %vm165, %v140, 0
  %v182 = vsel %vm165, %v141, 0
  %v185 = vsel %vm165, %v142, 0
  %v188 = vsel %vm165, %v143, 0
  %v191 = vsel %vm165, %v144, 0
  %v194 = vsel %vm165, %v145, 0
  %v197 = vsel %vm165, %v146, 0
  %v200 = vsel %vm165, %v147, 0
  %v203 = vsel %vm165, %v148, 0
  %v206 = vsel %vm165, %v149, 0
  %v209 = vsel %vm165, %v150, 0
  %v212 = vsel %vm165, %v151, 0
  %v215 = vsel %vm165, %v152, 0
  %v218 = vsel %vm165, %v153, 0
  %vm220 = vcmask 1043456
  %vm221 = vcmask 1044480
  %v222 = vsel %vm220, 4294967295, 65535
  %v223 = vsel %vm221, %v222, 0
  %v225 = vand.u32 %v163, %v223
  %227 = vmatprep.subr.bf16.mxu0 0
  %228 = vmatpush1.bf16.msra.mxu0 %v162
  %229 = vmatprep.subr.bf16.mxu0 0
  %230 = vmatpush1.bf16.msra.mxu0 %v225
  %231 = vmatprep.subr.bf16.mxu0 0
  %232 = vmatpush1.bf16.msra.mxu0 0
  %233 = vmatprep.subr.bf16.mxu0 0
  %234 = vmatpush1.bf16.msra.mxu0 0
  %235 = vmatprep.subr.bf16.mxu0 0
  %236 = vmatpush1.bf16.msra.mxu0 0
  %237 = vmatprep.subr.bf16.mxu0 0
  %238 = vmatpush1.bf16.msra.mxu0 0
  %239 = vmatprep.subr.bf16.mxu0 0
  %240 = vmatpush1.bf16.msra.mxu0 0
  %241 = vmatprep.subr.bf16.mxu0 0
  %242 = vmatpush1.bf16.msra.mxu0 0
  %243 = vmatprep.subr.bf16.mxu0 0
  %244 = vmatpush1.bf16.msra.mxu0 0
  %245 = vmatprep.subr.bf16.mxu0 0
  %246 = vmatpush1.bf16.msra.mxu0 0
  %247 = vmatprep.subr.bf16.mxu0 0
  %248 = vmatpush1.bf16.msra.mxu0 0
  %249 = vmatprep.subr.bf16.mxu0 0
  %250 = vmatpush1.bf16.msra.mxu0 0
  %251 = vmatprep.subr.bf16.mxu0 0
  %252 = vmatpush1.bf16.msra.mxu0 0
  %253 = vmatprep.subr.bf16.mxu0 0
  %254 = vmatpush1.bf16.msra.mxu0 0
  %255 = vmatprep.subr.bf16.mxu0 0
  %256 = vmatpush1.bf16.msra.mxu0 0
  %257 = vmatprep.subr.bf16.mxu0 0
  %258 = vmatpush1.bf16.msra.mxu0 0
  %259 = vmatprep.mubr.bf16.mxu0 0
  %260 = vmatmul.mubr.bf16.gmra.mrb[0].mxu0 %v167
  %v261 = vpop.f32.mrb[0].mxu0
  %v262 = vadd.f32 0.0, %v261
  %v263 = vpop.f32.mrb[0].mxu0
  %v264 = vpop.f32.mrb[0].mxu0
  %v265 = vadd.f32 0.0, %v264
  %v266 = vpop.f32.mrb[0].mxu0
  %267 = vmatprep.mubr.bf16.mxu0 0
  %268 = vmatmul.mubr.bf16.gmra.mrb[0].mxu0 %v170
  %v269 = vpop.f32.mrb[0].mxu0
  %v270 = vadd.f32 0.0, %v269
  %v271 = vpop.f32.mrb[0].mxu0
  %v272 = vpop.f32.mrb[0].mxu0
  %v273 = vadd.f32 0.0, %v272
  %v274 = vpop.f32.mrb[0].mxu0
  %275 = vmatprep.mubr.bf16.mxu0 0
  %276 = vmatmul.mubr.bf16.gmra.mrb[0].mxu0 %v173
  %v277 = vpop.f32.mrb[0].mxu0
  %v278 = vadd.f32 0.0, %v277
  %v279 = vpop.f32.mrb[0].mxu0
  %v280 = vpop.f32.mrb[0].mxu0
  %v281 = vadd.f32 0.0, %v280
  %v282 = vpop.f32.mrb[0].mxu0
  %283 = vmatprep.mubr.bf16.mxu0 0
  %284 = vmatmul.mubr.bf16.gmra.mrb[0].mxu0 %v176
  %v285 = vpop.f32.mrb[0].mxu0
  %v286 = vadd.f32 0.0, %v285
  %v287 = vpop.f32.mrb[0].mxu0
  %v288 = vpop.f32.mrb[0].mxu0
  %v289 = vadd.f32 0.0, %v288
  %v290 = vpop.f32.mrb[0].mxu0
  %291 = vmatprep.mubr.bf16.mxu0 0
  %292 = vmatmul.mubr.bf16.gmra.mrb[0].mxu0 %v179
  %v293 = vpop.f32.mrb[0].mxu0
  %v294 = vadd.f32 0.0, %v293
  %v295 = vpop.f32.mrb[0].mxu0
  %v296 = vpop.f32.mrb[0].mxu0
  %v297 = vadd.f32 0.0, %v296
  %v298 = vpop.f32.mrb[0].mxu0
  %299 = vmatprep.mubr.bf16.mxu0 0
  %300 = vmatmul.mubr.bf16.gmra.mrb[0].mxu0 %v182
  %v301 = vpop.f32.mrb[0].mxu0
  %v302 = vadd.f32 0.0, %v301
  %v303 = vpop.f32.mrb[0].mxu0
  %v304 = vpop.f32.mrb[0].mxu0
  %v305 = vadd.f32 0.0, %v304
  %v306 = vpop.f32.mrb[0].mxu0
  %307 = vmatprep.mubr.bf16.mxu0 0
  %308 = vmatmul.mubr.bf16.gmra.mrb[0].mxu0 %v185
  %v309 = vpop.f32.mrb[0].mxu0
  %v310 = vadd.f32 0.0, %v309
  %v311 = vpop.f32.mrb[0].mxu0
  %v312 = vpop.f32.mrb[0].mxu0
  %v313 = vadd.f32 0.0, %v312
  %v314 = vpop.f32.mrb[0].mxu0
  %315 = vmatprep.mubr.bf16.mxu0 0
  %316 = vmatmul.mubr.bf16.gmra.mrb[0].mxu0 %v188
  %v317 = vpop.f32.mrb[0].mxu0
  %v318 = vadd.f32 0.0, %v317
  %v319 = vpop.f32.mrb[0].mxu0
  %v320 = vpop.f32.mrb[0].mxu0
  %v321 = vadd.f32 0.0, %v320
  %v322 = vpop.f32.mrb[0].mxu0
  %323 = vmatprep.mubr.bf16.mxu0 0
  %324 = vmatmul.mubr.bf16.gmra.mrb[0].mxu0 %v191
  %v325 = vpop.f32.mrb[0].mxu0
  %v326 = vadd.f32 0.0, %v325
  %v327 = vpop.f32.mrb[0].mxu0
  %v328 = vpop.f32.mrb[0].mxu0
  %v329 = vadd.f32 0.0, %v328
  %v330 = vpop.f32.mrb[0].mxu0
  %331 = vmatprep.mubr.bf16.mxu0 0
  %332 = vmatmul.mubr.bf16.gmra.mrb[0].mxu0 %v194
  %v333 = vpop.f32.mrb[0].mxu0
  %v334 = vadd.f32 0.0, %v333
  %v335 = vpop.f32.mrb[0].mxu0
  %v336 = vpop.f32.mrb[0].mxu0
  %v337 = vadd.f32 0.0, %v336
  %v338 = vpop.f32.mrb[0].mxu0
  %339 = vmatprep.mubr.bf16.mxu0 0
  %340 = vmatmul.mubr.bf16.gmra.mrb[0].mxu0 %v197
  %v341 = vpop.f32.mrb[0].mxu0
  %v342 = vadd.f32 0.0, %v341
  %v343 = vpop.f32.mrb[0].mxu0
  %v344 = vpop.f32.mrb[0].mxu0
  %v345 = vadd.f32 0.0, %v344
  %v346 = vpop.f32.mrb[0].mxu0
  %347 = vmatprep.mubr.bf16.mxu0 0
  %348 = vmatmul.mubr.bf16.gmra.mrb[0].mxu0 %v200
  %v349 = vpop.f32.mrb[0].mxu0
  %v350 = vadd.f32 0.0, %v349
  %v351 = vpop.f32.mrb[0].mxu0
  %v352 = vpop.f32.mrb[0].mxu0
  %v353 = vadd.f32 0.0, %v352
  %v354 = vpop.f32.mrb[0].mxu0
  %355 = vmatprep.mubr.bf16.mxu0 0
  %356 = vmatmul.mubr.bf16.gmra.mrb[0].mxu0 %v203
  %v357 = vpop.f32.mrb[0].mxu0
  %v358 = vadd.f32 0.0, %v357
  %v359 = vpop.f32.mrb[0].mxu0
  %v360 = vpop.f32.mrb[0].mxu0
  %v361 = vadd.f32 0.0, %v360
  %v362 = vpop.f32.mrb[0].mxu0
  %363 = vmatprep.mubr.bf16.mxu0 0
  %364 = vmatmul.mubr.bf16.gmra.mrb[0].mxu0 %v206
  %v365 = vpop.f32.mrb[0].mxu0
  %v366 = vadd.f32 0.0, %v365
  %v367 = vpop.f32.mrb[0].mxu0
  %v368 = vpop.f32.mrb[0].mxu0
  %v369 = vadd.f32 0.0, %v368
  %v370 = vpop.f32.mrb[0].mxu0
  %371 = vmatprep.mubr.bf16.mxu0 0
  %372 = vmatmul.mubr.bf16.gmra.mrb[0].mxu0 %v209
  %v373 = vpop.f32.mrb[0].mxu0
  %v374 = vadd.f32 0.0, %v373
  %v375 = vpop.f32.mrb[0].mxu0
  %v376 = vpop.f32.mrb[0].mxu0
  %v377 = vadd.f32 0.0, %v376
  %v378 = vpop.f32.mrb[0].mxu0
  %379 = vmatprep.mubr.bf16.mxu0 0
  %380 = vmatmul.mubr.bf16.gmra.mrb[0].mxu0 %v212
  %v381 = vpop.f32.mrb[0].mxu0
  %v382 = vadd.f32 0.0, %v381
  %v383 = vpop.f32.mrb[0].mxu0
  %v384 = vpop.f32.mrb[0].mxu0
  %v385 = vadd.f32 0.0, %v384
  %v386 = vpop.f32.mrb[0].mxu0
  %387 = vmatprep.mubr.bf16.mxu0 0
  %388 = vmatmul.mubr.bf16.gmra.mrb[0].mxu0 %v215
  %v389 = vpop.f32.mrb[0].mxu0
  %v390 = vadd.f32 0.0, %v389
  %v391 = vpop.f32.mrb[0].mxu0
  %v392 = vpop.f32.mrb[0].mxu0
  %v393 = vadd.f32 0.0, %v392
  %v394 = vpop.f32.mrb[0].mxu0
  %395 = vmatprep.mubr.bf16.mxu0 0
  %396 = vmatmul.mubr.bf16.gmra.mrb[0].mxu0 %v218
  %v397 = vpop.f32.mrb[0].mxu0
  %v398 = vadd.f32 0.0, %v397
  %v399 = vpop.f32.mrb[0].mxu0
  %v400 = vpop.f32.mrb[0].mxu0
  %v401 = vadd.f32 0.0, %v400
  %v402 = vpop.f32.mrb[0].mxu0
  %403 = vdwg.mxu0
  %v404 = vld [vmem:[%s1] sm:$0xf]
  %v405 = vld [vmem:[%s1 + $0x4] sm:$0xf]
  %v406 = vld [vmem:[%s1 + $0x8] sm:$0xf]
  %v407 = vld [vmem:[%s1 + $0xc] sm:$0xf]
  %v408 = vld [vmem:[%s1 + $0x10] sm:$0xf]
  %v409 = vld [vmem:[%s1 + $0x14] sm:$0xf]
  %v410 = vld [vmem:[%s1 + $0x18] sm:$0xf]
  %v411 = vld [vmem:[%s1 + $0x1c] sm:$0xf]
  %v412 = vld [vmem:[%s1 + $0x20] sm:$0xf]
  %v413 = vld [vmem:[%s1 + $0x24] sm:$0xf]
  %v414 = vld [vmem:[%s1 + $0x28] sm:$0xf]
  %v415 = vld [vmem:[%s1 + $0x2c] sm:$0xf]
  %v416 = vld [vmem:[%s1 + $0x30] sm:$0xf]
  %v417 = vld [vmem:[%s1 + $0x34] sm:$0xf]
  %v418 = vld [vmem:[%s1 + $0x38] sm:$0xf]
  %v419 = vld [vmem:[%s1 + $0x3c] sm:$0xf]
  %v420 = vld [vmem:[%s1 + $0x40] sm:$0xf]
  %v421 = vld [vmem:[%s1 + $0x44] sm:$0xf]
  %v422 = vld [vmem:[%s1 + $0x48] sm:$0xf]
  %v423 = vld [vmem:[%s1 + $0x4c] sm:$0xf]
  %v424 = vld [vmem:[%s1 + $0x50] sm:$0xf]
  %v425 = vld [vmem:[%s1 + $0x54] sm:$0xf]
  %v426 = vld [vmem:[%s1 + $0x58] sm:$0xf]
  %v427 = vld [vmem:[%s1 + $0x5c] sm:$0xf]
  %v428 = vld [vmem:[%s1 + $0x60] sm:$0xf]
  %v429 = vld [vmem:[%s1 + $0x64] sm:$0xf]
  %v430 = vld [vmem:[%s1 + $0x68] sm:$0xf]
  %v431 = vld [vmem:[%s1 + $0x6c] sm:$0xf]
  %v432 = vld [vmem:[%s1 + $0x70] sm:$0xf]
  %v433 = vld [vmem:[%s1 + $0x74] sm:$0xf]
  %v434 = vld [vmem:[%s1 + $0x78] sm:$0xf]
  %v435 = vld [vmem:[%s1 + $0x7c] sm:$0xf]
  %v436 = vld [vmem:[%s1 + $0x80] sm:$0xf]
  %v437 = vld [vmem:[%s1 + $0x84] sm:$0xf]
  %v438 = vld [vmem:[%s1 + $0x88] sm:$0xf]
  %v439 = vld [vmem:[%s1 + $0x8c] sm:$0xf]
  %v476 = vunpack.c.l.b16 %v404
  %v477 = vunpack.c.l.b16 %v405
  %v478 = vunpack.c.l.b16 %v406
  %v479 = vunpack.c.l.b16 %v407
  %v480 = vunpack.c.l.b16 %v408
  %v481 = vunpack.c.l.b16 %v409
  %v482 = vunpack.c.l.b16 %v410
  %v483 = vunpack.c.l.b16 %v411
  %v484 = vunpack.c.l.b16 %v412
  %v485 = vunpack.c.l.b16 %v413
  %v486 = vunpack.c.l.b16 %v414
  %v487 = vunpack.c.l.b16 %v415
  %v488 = vunpack.c.l.b16 %v416
  %v489 = vunpack.c.l.b16 %v417
  %v490 = vunpack.c.l.b16 %v418
  %v491 = vunpack.c.l.b16 %v419
  %v492 = vunpack.c.l.b16 %v420
  %v493 = vunpack.c.l.b16 %v421
  %v494 = vunpack.c.l.b16 %v422
  %v495 = vunpack.c.l.b16 %v423
  %v496 = vunpack.c.l.b16 %v424
  %v497 = vunpack.c.l.b16 %v425
  %v498 = vunpack.c.l.b16 %v426
  %v499 = vunpack.c.l.b16 %v427
  %v500 = vunpack.c.l.b16 %v428
  %v501 = vunpack.c.l.b16 %v429
  %v502 = vunpack.c.l.b16 %v430
  %v503 = vunpack.c.l.b16 %v431
  %v504 = vunpack.c.l.b16 %v432
  %v505 = vunpack.c.l.b16 %v433
  %v506 = vunpack.c.l.b16 %v434
  %v507 = vunpack.c.l.b16 %v435
  %v508 = vunpack.c.l.b16 %v436
  %v509 = vunpack.c.l.b16 %v437
  %v510 = vunpack.c.l.b16 %v438
  %v511 = vunpack.c.l.b16 %v439
  %v512 = vpack.c.b16 %v477, %v476
  %v513 = vpack.c.b16 %v479, %v478
  %v514 = vpack.c.b16 %v481, %v480
  %v515 = vpack.c.b16 %v483, %v482
  %v516 = vpack.c.b16 %v485, %v484
  %v517 = vpack.c.b16 %v487, %v486
  %v518 = vpack.c.b16 %v489, %v488
  %v519 = vpack.c.b16 %v491, %v490
  %v520 = vpack.c.b16 %v493, %v492
  %v521 = vpack.c.b16 %v495, %v494
  %v522 = vpack.c.b16 %v497, %v496
  %v523 = vpack.c.b16 %v499, %v498
  %v524 = vpack.c.b16 %v501, %v500
  %v525 = vpack.c.b16 %v503, %v502
  %v526 = vpack.c.b16 %v505, %v504
  %v527 = vpack.c.b16 %v507, %v506
  %v528 = vpack.c.b16 %v509, %v508
  %v529 = vpack.c.b16 %v511, %v510
  %v531 = vsel %vm165, %v512, 0
  %v534 = vsel %vm165, %v513, 0
  %v537 = vsel %vm165, %v514, 0
  %v540 = vsel %vm165, %v515, 0
  %v543 = vsel %vm165, %v516, 0
  %v546 = vsel %vm165, %v517, 0
  %v549 = vsel %vm165, %v518, 0
  %v552 = vsel %vm165, %v519, 0
  %v555 = vsel %vm165, %v520, 0
  %v558 = vsel %vm165, %v521, 0
  %v561 = vsel %vm165, %v522, 0
  %v564 = vsel %vm165, %v523, 0
  %v567 = vsel %vm165, %v524, 0
  %v570 = vsel %vm165, %v525, 0
  %v573 = vsel %vm165, %v526, 0
  %v576 = vsel %vm165, %v527, 0
  %v579 = vsel %vm165, %v528, 0
  %v582 = vsel %vm165, %v529, 0
  %584 = vmatprep.subr.bf16.mxu0 0
  %585 = vmatpush1.bf16.msra.mxu0 %v162
  %586 = vmatprep.subr.bf16.mxu0 0
  %587 = vmatpush1.bf16.msra.mxu0 %v225
  %588 = vmatprep.subr.bf16.mxu0 0
  %589 = vmatpush1.bf16.msra.mxu0 0
  %590 = vmatprep.subr.bf16.mxu0 0
  %591 = vmatpush1.bf16.msra.mxu0 0
  %592 = vmatprep.subr.bf16.mxu0 0
  %593 = vmatpush1.bf16.msra.mxu0 0
  %594 = vmatprep.subr.bf16.mxu0 0
  %595 = vmatpush1.bf16.msra.mxu0 0
  %596 = vmatprep.subr.bf16.mxu0 0
  %597 = vmatpush1.bf16.msra.mxu0 0
  %598 = vmatprep.subr.bf16.mxu0 0
  %599 = vmatpush1.bf16.msra.mxu0 0
  %600 = vmatprep.subr.bf16.mxu0 0
  %601 = vmatpush1.bf16.msra.mxu0 0
  %602 = vmatprep.subr.bf16.mxu0 0
  %603 = vmatpush1.bf16.msra.mxu0 0
  %604 = vmatprep.subr.bf16.mxu0 0
  %605 = vmatpush1.bf16.msra.mxu0 0
  %606 = vmatprep.subr.bf16.mxu0 0
  %607 = vmatpush1.bf16.msra.mxu0 0
  %608 = vmatprep.subr.bf16.mxu0 0
  %609 = vmatpush1.bf16.msra.mxu0 0
  %610 = vmatprep.subr.bf16.mxu0 0
  %611 = vmatpush1.bf16.msra.mxu0 0
  %612 = vmatprep.subr.bf16.mxu0 0
  %613 = vmatpush1.bf16.msra.mxu0 0
  %614 = vmatprep.subr.bf16.mxu0 0
  %615 = vmatpush1.bf16.msra.mxu0 0
  %616 = vmatprep.mubr.bf16.mxu0 0
  %617 = vmatmul.mubr.bf16.gmra.mrb[0].mxu0 %v531
  %v618 = vpop.f32.mrb[0].mxu0
  %v619 = vadd.f32 0.0, %v618
  %v620 = vpop.f32.mrb[0].mxu0
  %v621 = vpop.f32.mrb[0].mxu0
  %v622 = vadd.f32 0.0, %v621
  %v623 = vpop.f32.mrb[0].mxu0
  %624 = vmatprep.mubr.bf16.mxu0 0
  %625 = vmatmul.mubr.bf16.gmra.mrb[0].mxu0 %v534
  %v626 = vpop.f32.mrb[0].mxu0
  %v627 = vadd.f32 0.0, %v626
  %v628 = vpop.f32.mrb[0].mxu0
  %v629 = vpop.f32.mrb[0].mxu0
  %v630 = vadd.f32 0.0, %v629
  %v631 = vpop.f32.mrb[0].mxu0
  %632 = vmatprep.mubr.bf16.mxu0 0
  %633 = vmatmul.mubr.bf16.gmra.mrb[0].mxu0 %v537
  %v634 = vpop.f32.mrb[0].mxu0
  %v635 = vadd.f32 0.0, %v634
  %v636 = vpop.f32.mrb[0].mxu0
  %v637 = vpop.f32.mrb[0].mxu0
  %v638 = vadd.f32 0.0, %v637
  %v639 = vpop.f32.mrb[0].mxu0
  %640 = vmatprep.mubr.bf16.mxu0 0
  %641 = vmatmul.mubr.bf16.gmra.mrb[0].mxu0 %v540
  %v642 = vpop.f32.mrb[0].mxu0
  %v643 = vadd.f32 0.0, %v642
  %v644 = vpop.f32.mrb[0].mxu0
  %v645 = vpop.f32.mrb[0].mxu0
  %v646 = vadd.f32 0.0, %v645
  %v647 = vpop.f32.mrb[0].mxu0
  %648 = vmatprep.mubr.bf16.mxu0 0
  %649 = vmatmul.mubr.bf16.gmra.mrb[0].mxu0 %v543
  %v650 = vpop.f32.mrb[0].mxu0
  %v651 = vadd.f32 0.0, %v650
  %v652 = vpop.f32.mrb[0].mxu0
  %v653 = vpop.f32.mrb[0].mxu0
  %v654 = vadd.f32 0.0, %v653
  %v655 = vpop.f32.mrb[0].mxu0
  %656 = vmatprep.mubr.bf16.mxu0 0
  %657 = vmatmul.mubr.bf16.gmra.mrb[0].mxu0 %v546
  %v658 = vpop.f32.mrb[0].mxu0
  %v659 = vadd.f32 0.0, %v658
  %v660 = vpop.f32.mrb[0].mxu0
  %v661 = vpop.f32.mrb[0].mxu0
  %v662 = vadd.f32 0.0, %v661
  %v663 = vpop.f32.mrb[0].mxu0
  %664 = vmatprep.mubr.bf16.mxu0 0
  %665 = vmatmul.mubr.bf16.gmra.mrb[0].mxu0 %v549
  %v666 = vpop.f32.mrb[0].mxu0
  %v667 = vadd.f32 0.0, %v666
  %v668 = vpop.f32.mrb[0].mxu0
  %v669 = vpop.f32.mrb[0].mxu0
  %v670 = vadd.f32 0.0, %v669
  %v671 = vpop.f32.mrb[0].mxu0
  %672 = vmatprep.mubr.bf16.mxu0 0
  %673 = vmatmul.mubr.bf16.gmra.mrb[0].mxu0 %v552
  %v674 = vpop.f32.mrb[0].mxu0
  %v675 = vadd.f32 0.0, %v674
  %v676 = vpop.f32.mrb[0].mxu0
  %v677 = vpop.f32.mrb[0].mxu0
  %v678 = vadd.f32 0.0, %v677
  %v679 = vpop.f32.mrb[0].mxu0
  %680 = vmatprep.mubr.bf16.mxu0 0
  %681 = vmatmul.mubr.bf16.gmra.mrb[0].mxu0 %v555
  %v682 = vpop.f32.mrb[0].mxu0
  %v683 = vadd.f32 0.0, %v682
  %v684 = vpop.f32.mrb[0].mxu0
  %v685 = vpop.f32.mrb[0].mxu0
  %v686 = vadd.f32 0.0, %v685
  %v687 = vpop.f32.mrb[0].mxu0
  %688 = vmatprep.mubr.bf16.mxu0 0
  %689 = vmatmul.mubr.bf16.gmra.mrb[0].mxu0 %v558
  %v690 = vpop.f32.mrb[0].mxu0
  %v691 = vadd.f32 0.0, %v690
  %v692 = vpop.f32.mrb[0].mxu0
  %v693 = vpop.f32.mrb[0].mxu0
  %v694 = vadd.f32 0.0, %v693
  %v695 = vpop.f32.mrb[0].mxu0
  %696 = vmatprep.mubr.bf16.mxu0 0
  %697 = vmatmul.mubr.bf16.gmra.mrb[0].mxu0 %v561
  %v698 = vpop.f32.mrb[0].mxu0
  %v699 = vadd.f32 0.0, %v698
  %v700 = vpop.f32.mrb[0].mxu0
  %v701 = vpop.f32.mrb[0].mxu0
  %v702 = vadd.f32 0.0, %v701
  %v703 = vpop.f32.mrb[0].mxu0
  %704 = vmatprep.mubr.bf16.mxu0 0
  %705 = vmatmul.mubr.bf16.gmra.mrb[0].mxu0 %v564
  %v706 = vpop.f32.mrb[0].mxu0
  %v707 = vadd.f32 0.0, %v706
  %v708 = vpop.f32.mrb[0].mxu0
  %v709 = vpop.f32.mrb[0].mxu0
  %v710 = vadd.f32 0.0, %v709
  %v711 = vpop.f32.mrb[0].mxu0
  %712 = vmatprep.mubr.bf16.mxu0 0
  %713 = vmatmul.mubr.bf16.gmra.mrb[0].mxu0 %v567
  %v714 = vpop.f32.mrb[0].mxu0
  %v715 = vadd.f32 0.0, %v714
  %v716 = vpop.f32.mrb[0].mxu0
  %v717 = vpop.f32.mrb[0].mxu0
  %v718 = vadd.f32 0.0, %v717
  %v719 = vpop.f32.mrb[0].mxu0
  %720 = vmatprep.mubr.bf16.mxu0 0
  %721 = vmatmul.mubr.bf16.gmra.mrb[0].mxu0 %v570
  %v722 = vpop.f32.mrb[0].mxu0
  %v723 = vadd.f32 0.0, %v722
  %v724 = vpop.f32.mrb[0].mxu0
  %v725 = vpop.f32.mrb[0].mxu0
  %v726 = vadd.f32 0.0, %v725
  %v727 = vpop.f32.mrb[0].mxu0
  %728 = vmatprep.mubr.bf16.mxu0 0
  %729 = vmatmul.mubr.bf16.gmra.mrb[0].mxu0 %v573
  %v730 = vpop.f32.mrb[0].mxu0
  %v731 = vadd.f32 0.0, %v730
  %v732 = vpop.f32.mrb[0].mxu0
  %v733 = vpop.f32.mrb[0].mxu0
  %v734 = vadd.f32 0.0, %v733
  %v735 = vpop.f32.mrb[0].mxu0
  %736 = vmatprep.mubr.bf16.mxu0 0
  %737 = vmatmul.mubr.bf16.gmra.mrb[0].mxu0 %v576
  %v738 = vpop.f32.mrb[0].mxu0
  %v739 = vadd.f32 0.0, %v738
  %v740 = vpop.f32.mrb[0].mxu0
  %v741 = vpop.f32.mrb[0].mxu0
  %v742 = vadd.f32 0.0, %v741
  %v743 = vpop.f32.mrb[0].mxu0
  %744 = vmatprep.mubr.bf16.mxu0 0
  %745 = vmatmul.mubr.bf16.gmra.mrb[0].mxu0 %v579
  %v746 = vpop.f32.mrb[0].mxu0
  %v747 = vadd.f32 0.0, %v746
  %v748 = vpop.f32.mrb[0].mxu0
  %v749 = vpop.f32.mrb[0].mxu0
  %v750 = vadd.f32 0.0, %v749
  %v751 = vpop.f32.mrb[0].mxu0
  %752 = vmatprep.mubr.bf16.mxu0 0
  %753 = vmatmul.mubr.bf16.gmra.mrb[0].mxu0 %v582
  %v754 = vpop.f32.mrb[0].mxu0
  %v755 = vadd.f32 0.0, %v754
  %v756 = vpop.f32.mrb[0].mxu0
  %v757 = vpop.f32.mrb[0].mxu0
  %v758 = vadd.f32 0.0, %v757
  %v759 = vpop.f32.mrb[0].mxu0
  %760 = vdwg.mxu0
  %v761 = vmax.f32 %v262, %v619
  %v762 = vmax.f32 %v265, %v622
  %v763 = vmax.f32 %v270, %v627
  %v764 = vmax.f32 %v273, %v630
  %v765 = vmax.f32 %v278, %v635
  %v766 = vmax.f32 %v281, %v638
  %v767 = vmax.f32 %v286, %v643
  %v768 = vmax.f32 %v289, %v646
  %v769 = vmax.f32 %v294, %v651
  %v770 = vmax.f32 %v297, %v654
  %v771 = vmax.f32 %v302, %v659
  %v772 = vmax.f32 %v305, %v662
  %v773 = vmax.f32 %v310, %v667
  %v774 = vmax.f32 %v313, %v670
  %v775 = vmax.f32 %v318, %v675
  %v776 = vmax.f32 %v321, %v678
  %v777 = vmax.f32 %v326, %v683
  %v778 = vmax.f32 %v329, %v686
  %v779 = vmax.f32 %v334, %v691
  %v780 = vmax.f32 %v337, %v694
  %v781 = vmax.f32 %v342, %v699
  %v782 = vmax.f32 %v345, %v702
  %v783 = vmax.f32 %v350, %v707
  %v784 = vmax.f32 %v353, %v710
  %v785 = vmax.f32 %v358, %v715
  %v786 = vmax.f32 %v361, %v718
  %v787 = vmax.f32 %v366, %v723
  %v788 = vmax.f32 %v369, %v726
  %v789 = vmax.f32 %v374, %v731
  %v790 = vmax.f32 %v377, %v734
  %v791 = vmax.f32 %v382, %v739
  %v792 = vmax.f32 %v385, %v742
  %v793 = vmax.f32 %v390, %v747
  %v794 = vmax.f32 %v393, %v750
  %v795 = vmax.f32 %v398, %v755
  %v796 = vmax.f32 %v401, %v758
  %v797 = vld [vmem:[%s2] sm:$0xf]
  %v798 = vld [vmem:[%s2 + $0x4] sm:$0xf]
  %v799 = vld [vmem:[%s2 + $0x8] sm:$0xf]
  %v800 = vld [vmem:[%s2 + $0xc] sm:$0xf]
  %v801 = vld [vmem:[%s2 + $0x10] sm:$0xf]
  %v802 = vld [vmem:[%s2 + $0x14] sm:$0xf]
  %v803 = vld [vmem:[%s2 + $0x18] sm:$0xf]
  %v804 = vld [vmem:[%s2 + $0x1c] sm:$0xf]
  %v805 = vld [vmem:[%s2 + $0x20] sm:$0xf]
  %v806 = vld [vmem:[%s2 + $0x24] sm:$0xf]
  %v807 = vld [vmem:[%s2 + $0x28] sm:$0xf]
  %v808 = vld [vmem:[%s2 + $0x2c] sm:$0xf]
  %v809 = vld [vmem:[%s2 + $0x30] sm:$0xf]
  %v810 = vld [vmem:[%s2 + $0x34] sm:$0xf]
  %v811 = vld [vmem:[%s2 + $0x38] sm:$0xf]
  %v812 = vld [vmem:[%s2 + $0x3c] sm:$0xf]
  %v813 = vld [vmem:[%s2 + $0x40] sm:$0xf]
  %v814 = vld [vmem:[%s2 + $0x44] sm:$0xf]
  %v815 = vld [vmem:[%s2 + $0x48] sm:$0xf]
  %v816 = vld [vmem:[%s2 + $0x4c] sm:$0xf]
  %v817 = vld [vmem:[%s2 + $0x50] sm:$0xf]
  %v818 = vld [vmem:[%s2 + $0x54] sm:$0xf]
  %v819 = vld [vmem:[%s2 + $0x58] sm:$0xf]
  %v820 = vld [vmem:[%s2 + $0x5c] sm:$0xf]
  %v821 = vld [vmem:[%s2 + $0x60] sm:$0xf]
  %v822 = vld [vmem:[%s2 + $0x64] sm:$0xf]
  %v823 = vld [vmem:[%s2 + $0x68] sm:$0xf]
  %v824 = vld [vmem:[%s2 + $0x6c] sm:$0xf]
  %v825 = vld [vmem:[%s2 + $0x70] sm:$0xf]
  %v826 = vld [vmem:[%s2 + $0x74] sm:$0xf]
  %v827 = vld [vmem:[%s2 + $0x78] sm:$0xf]
  %v828 = vld [vmem:[%s2 + $0x7c] sm:$0xf]
  %v829 = vld [vmem:[%s2 + $0x80] sm:$0xf]
  %v830 = vld [vmem:[%s2 + $0x84] sm:$0xf]
  %v831 = vld [vmem:[%s2 + $0x88] sm:$0xf]
  %v832 = vld [vmem:[%s2 + $0x8c] sm:$0xf]
  %v869 = vunpack.c.l.b16 %v797
  %v870 = vunpack.c.l.b16 %v798
  %v871 = vunpack.c.l.b16 %v799
  %v872 = vunpack.c.l.b16 %v800
  %v873 = vunpack.c.l.b16 %v801
  %v874 = vunpack.c.l.b16 %v802
  %v875 = vunpack.c.l.b16 %v803
  %v876 = vunpack.c.l.b16 %v804
  %v877 = vunpack.c.l.b16 %v805
  %v878 = vunpack.c.l.b16 %v806
  %v879 = vunpack.c.l.b16 %v807
  %v880 = vunpack.c.l.b16 %v808
  %v881 = vunpack.c.l.b16 %v809
  %v882 = vunpack.c.l.b16 %v810
  %v883 = vunpack.c.l.b16 %v811
  %v884 = vunpack.c.l.b16 %v812
  %v885 = vunpack.c.l.b16 %v813
  %v886 = vunpack.c.l.b16 %v814
  %v887 = vunpack.c.l.b16 %v815
  %v888 = vunpack.c.l.b16 %v816
  %v889 = vunpack.c.l.b16 %v817
  %v890 = vunpack.c.l.b16 %v818
  %v891 = vunpack.c.l.b16 %v819
  %v892 = vunpack.c.l.b16 %v820
  %v893 = vunpack.c.l.b16 %v821
  %v894 = vunpack.c.l.b16 %v822
  %v895 = vunpack.c.l.b16 %v823
  %v896 = vunpack.c.l.b16 %v824
  %v897 = vunpack.c.l.b16 %v825
  %v898 = vunpack.c.l.b16 %v826
  %v899 = vunpack.c.l.b16 %v827
  %v900 = vunpack.c.l.b16 %v828
  %v901 = vunpack.c.l.b16 %v829
  %v902 = vunpack.c.l.b16 %v830
  %v903 = vunpack.c.l.b16 %v831
  %v904 = vunpack.c.l.b16 %v832
  %v905 = vpack.c.b16 %v870, %v869
  %v906 = vpack.c.b16 %v872, %v871
  %v907 = vpack.c.b16 %v874, %v873
  %v908 = vpack.c.b16 %v876, %v875
  %v909 = vpack.c.b16 %v878, %v877
  %v910 = vpack.c.b16 %v880, %v879
  %v911 = vpack.c.b16 %v882, %v881
  %v912 = vpack.c.b16 %v884, %v883
  %v913 = vpack.c.b16 %v886, %v885
  %v914 = vpack.c.b16 %v888, %v887
  %v915 = vpack.c.b16 %v890, %v889
  %v916 = vpack.c.b16 %v892, %v891
  %v917 = vpack.c.b16 %v894, %v893
  %v918 = vpack.c.b16 %v896, %v895
  %v919 = vpack.c.b16 %v898, %v897
  %v920 = vpack.c.b16 %v900, %v899
  %v921 = vpack.c.b16 %v902, %v901
  %v922 = vpack.c.b16 %v904, %v903
  %v924 = vsel %vm165, %v905, 0
  %v927 = vsel %vm165, %v906, 0
  %v930 = vsel %vm165, %v907, 0
  %v933 = vsel %vm165, %v908, 0
  %v936 = vsel %vm165, %v909, 0
  %v939 = vsel %vm165, %v910, 0
  %v942 = vsel %vm165, %v911, 0
  %v945 = vsel %vm165, %v912, 0
  %v948 = vsel %vm165, %v913, 0
  %v951 = vsel %vm165, %v914, 0
  %v954 = vsel %vm165, %v915, 0
  %v957 = vsel %vm165, %v916, 0
  %v960 = vsel %vm165, %v917, 0
  %v963 = vsel %vm165, %v918, 0
  %v966 = vsel %vm165, %v919, 0
  %v969 = vsel %vm165, %v920, 0
  %v972 = vsel %vm165, %v921, 0
  %v975 = vsel %vm165, %v922, 0
  %977 = vmatprep.subr.bf16.mxu0 0
  %978 = vmatpush1.bf16.msra.mxu0 %v162
  %979 = vmatprep.subr.bf16.mxu0 0
  %980 = vmatpush1.bf16.msra.mxu0 %v225
  %981 = vmatprep.subr.bf16.mxu0 0
  %982 = vmatpush1.bf16.msra.mxu0 0
  %983 = vmatprep.subr.bf16.mxu0 0
  %984 = vmatpush1.bf16.msra.mxu0 0
  %985 = vmatprep.subr.bf16.mxu0 0
  %986 = vmatpush1.bf16.msra.mxu0 0
  %987 = vmatprep.subr.bf16.mxu0 0
  %988 = vmatpush1.bf16.msra.mxu0 0
  %989 = vmatprep.subr.bf16.mxu0 0
  %990 = vmatpush1.bf16.msra.mxu0 0
  %991 = vmatprep.subr.bf16.mxu0 0
  %992 = vmatpush1.bf16.msra.mxu0 0
  %993 = vmatprep.subr.bf16.mxu0 0
  %994 = vmatpush1.bf16.msra.mxu0 0
  %995 = vmatprep.subr.bf16.mxu0 0
  %996 = vmatpush1.bf16.msra.mxu0 0
  %997 = vmatprep.subr.bf16.mxu0 0
  %998 = vmatpush1.bf16.msra.mxu0 0
  %999 = vmatprep.subr.bf16.mxu0 0
  %1000 = vmatpush1.bf16.msra.mxu0 0
  %1001 = vmatprep.subr.bf16.mxu0 0
  %1002 = vmatpush1.bf16.msra.mxu0 0
  %1003 = vmatprep.subr.bf16.mxu0 0
  %1004 = vmatpush1.bf16.msra.mxu0 0
  %1005 = vmatprep.subr.bf16.mxu0 0
  %1006 = vmatpush1.bf16.msra.mxu0 0
  %1007 = vmatprep.subr.bf16.mxu0 0
  %1008 = vmatpush1.bf16.msra.mxu0 0
  %1009 = vmatprep.mubr.bf16.mxu0 0
  %1010 = vmatmul.mubr.bf16.gmra.mrb[0].mxu0 %v924
  %v1011 = vpop.f32.mrb[0].mxu0
  %v1012 = vadd.f32 0.0, %v1011
  %v1013 = vpop.f32.mrb[0].mxu0
  %v1014 = vpop.f32.mrb[0].mxu0
  %v1015 = vadd.f32 0.0, %v1014
  %v1016 = vpop.f32.mrb[0].mxu0
  %1017 = vmatprep.mubr.bf16.mxu0 0
  %1018 = vmatmul.mubr.bf16.gmra.mrb[0].mxu0 %v927
  %v1019 = vpop.f32.mrb[0].mxu0
  %v1020 = vadd.f32 0.0, %v1019
  %v1021 = vpop.f32.mrb[0].mxu0
  %v1022 = vpop.f32.mrb[0].mxu0
  %v1023 = vadd.f32 0.0, %v1022
  %v1024 = vpop.f32.mrb[0].mxu0
  %1025 = vmatprep.mubr.bf16.mxu0 0
  %1026 = vmatmul.mubr.bf16.gmra.mrb[0].mxu0 %v930
  %v1027 = vpop.f32.mrb[0].mxu0
  %v1028 = vadd.f32 0.0, %v1027
  %v1029 = vpop.f32.mrb[0].mxu0
  %v1030 = vpop.f32.mrb[0].mxu0
  %v1031 = vadd.f32 0.0, %v1030
  %v1032 = vpop.f32.mrb[0].mxu0
  %1033 = vmatprep.mubr.bf16.mxu0 0
  %1034 = vmatmul.mubr.bf16.gmra.mrb[0].mxu0 %v933
  %v1035 = vpop.f32.mrb[0].mxu0
  %v1036 = vadd.f32 0.0, %v1035
  %v1037 = vpop.f32.mrb[0].mxu0
  %v1038 = vpop.f32.mrb[0].mxu0
  %v1039 = vadd.f32 0.0, %v1038
  %v1040 = vpop.f32.mrb[0].mxu0
  %1041 = vmatprep.mubr.bf16.mxu0 0
  %1042 = vmatmul.mubr.bf16.gmra.mrb[0].mxu0 %v936
  %v1043 = vpop.f32.mrb[0].mxu0
  %v1044 = vadd.f32 0.0, %v1043
  %v1045 = vpop.f32.mrb[0].mxu0
  %v1046 = vpop.f32.mrb[0].mxu0
  %v1047 = vadd.f32 0.0, %v1046
  %v1048 = vpop.f32.mrb[0].mxu0
  %1049 = vmatprep.mubr.bf16.mxu0 0
  %1050 = vmatmul.mubr.bf16.gmra.mrb[0].mxu0 %v939
  %v1051 = vpop.f32.mrb[0].mxu0
  %v1052 = vadd.f32 0.0, %v1051
  %v1053 = vpop.f32.mrb[0].mxu0
  %v1054 = vpop.f32.mrb[0].mxu0
  %v1055 = vadd.f32 0.0, %v1054
  %v1056 = vpop.f32.mrb[0].mxu0
  %1057 = vmatprep.mubr.bf16.mxu0 0
  %1058 = vmatmul.mubr.bf16.gmra.mrb[0].mxu0 %v942
  %v1059 = vpop.f32.mrb[0].mxu0
  %v1060 = vadd.f32 0.0, %v1059
  %v1061 = vpop.f32.mrb[0].mxu0
  %v1062 = vpop.f32.mrb[0].mxu0
  %v1063 = vadd.f32 0.0, %v1062
  %v1064 = vpop.f32.mrb[0].mxu0
  %1065 = vmatprep.mubr.bf16.mxu0 0
  %1066 = vmatmul.mubr.bf16.gmra.mrb[0].mxu0 %v945
  %v1067 = vpop.f32.mrb[0].mxu0
  %v1068 = vadd.f32 0.0, %v1067
  %v1069 = vpop.f32.mrb[0].mxu0
  %v1070 = vpop.f32.mrb[0].mxu0
  %v1071 = vadd.f32 0.0, %v1070
  %v1072 = vpop.f32.mrb[0].mxu0
  %1073 = vmatprep.mubr.bf16.mxu0 0
  %1074 = vmatmul.mubr.bf16.gmra.mrb[0].mxu0 %v948
  %v1075 = vpop.f32.mrb[0].mxu0
  %v1076 = vadd.f32 0.0, %v1075
  %v1077 = vpop.f32.mrb[0].mxu0
  %v1078 = vpop.f32.mrb[0].mxu0
  %v1079 = vadd.f32 0.0, %v1078
  %v1080 = vpop.f32.mrb[0].mxu0
  %1081 = vmatprep.mubr.bf16.mxu0 0
  %1082 = vmatmul.mubr.bf16.gmra.mrb[0].mxu0 %v951
  %v1083 = vpop.f32.mrb[0].mxu0
  %v1084 = vadd.f32 0.0, %v1083
  %v1085 = vpop.f32.mrb[0].mxu0
  %v1086 = vpop.f32.mrb[0].mxu0
  %v1087 = vadd.f32 0.0, %v1086
  %v1088 = vpop.f32.mrb[0].mxu0
  %1089 = vmatprep.mubr.bf16.mxu0 0
  %1090 = vmatmul.mubr.bf16.gmra.mrb[0].mxu0 %v954
  %v1091 = vpop.f32.mrb[0].mxu0
  %v1092 = vadd.f32 0.0, %v1091
  %v1093 = vpop.f32.mrb[0].mxu0
  %v1094 = vpop.f32.mrb[0].mxu0
  %v1095 = vadd.f32 0.0, %v1094
  %v1096 = vpop.f32.mrb[0].mxu0
  %1097 = vmatprep.mubr.bf16.mxu0 0
  %1098 = vmatmul.mubr.bf16.gmra.mrb[0].mxu0 %v957
  %v1099 = vpop.f32.mrb[0].mxu0
  %v1100 = vadd.f32 0.0, %v1099
  %v1101 = vpop.f32.mrb[0].mxu0
  %v1102 = vpop.f32.mrb[0].mxu0
  %v1103 = vadd.f32 0.0, %v1102
  %v1104 = vpop.f32.mrb[0].mxu0
  %1105 = vmatprep.mubr.bf16.mxu0 0
  %1106 = vmatmul.mubr.bf16.gmra.mrb[0].mxu0 %v960
  %v1107 = vpop.f32.mrb[0].mxu0
  %v1108 = vadd.f32 0.0, %v1107
  %v1109 = vpop.f32.mrb[0].mxu0
  %v1110 = vpop.f32.mrb[0].mxu0
  %v1111 = vadd.f32 0.0, %v1110
  %v1112 = vpop.f32.mrb[0].mxu0
  %1113 = vmatprep.mubr.bf16.mxu0 0
  %1114 = vmatmul.mubr.bf16.gmra.mrb[0].mxu0 %v963
  %v1115 = vpop.f32.mrb[0].mxu0
  %v1116 = vadd.f32 0.0, %v1115
  %v1117 = vpop.f32.mrb[0].mxu0
  %v1118 = vpop.f32.mrb[0].mxu0
  %v1119 = vadd.f32 0.0, %v1118
  %v1120 = vpop.f32.mrb[0].mxu0
  %1121 = vmatprep.mubr.bf16.mxu0 0
  %1122 = vmatmul.mubr.bf16.gmra.mrb[0].mxu0 %v966
  %v1123 = vpop.f32.mrb[0].mxu0
  %v1124 = vadd.f32 0.0, %v1123
  %v1125 = vpop.f32.mrb[0].mxu0
  %v1126 = vpop.f32.mrb[0].mxu0
  %v1127 = vadd.f32 0.0, %v1126
  %v1128 = vpop.f32.mrb[0].mxu0
  %1129 = vmatprep.mubr.bf16.mxu0 0
  %1130 = vmatmul.mubr.bf16.gmra.mrb[0].mxu0 %v969
  %v1131 = vpop.f32.mrb[0].mxu0
  %v1132 = vadd.f32 0.0, %v1131
  %v1133 = vpop.f32.mrb[0].mxu0
  %v1134 = vpop.f32.mrb[0].mxu0
  %v1135 = vadd.f32 0.0, %v1134
  %v1136 = vpop.f32.mrb[0].mxu0
  %1137 = vmatprep.mubr.bf16.mxu0 0
  %1138 = vmatmul.mubr.bf16.gmra.mrb[0].mxu0 %v972
  %v1139 = vpop.f32.mrb[0].mxu0
  %v1140 = vadd.f32 0.0, %v1139
  %v1141 = vpop.f32.mrb[0].mxu0
  %v1142 = vpop.f32.mrb[0].mxu0
  %v1143 = vadd.f32 0.0, %v1142
  %v1144 = vpop.f32.mrb[0].mxu0
  %1145 = vmatprep.mubr.bf16.mxu0 0
  %1146 = vmatmul.mubr.bf16.gmra.mrb[0].mxu0 %v975
  %v1147 = vpop.f32.mrb[0].mxu0
  %v1148 = vadd.f32 0.0, %v1147
  %v1149 = vpop.f32.mrb[0].mxu0
  %v1150 = vpop.f32.mrb[0].mxu0
  %v1151 = vadd.f32 0.0, %v1150
  %v1152 = vpop.f32.mrb[0].mxu0
  %1153 = vdwg.mxu0
  %v1154 = vmax.f32 %v761, %v1012
  %v1155 = vmax.f32 %v762, %v1015
  %v1156 = vmax.f32 %v763, %v1020
  %v1157 = vmax.f32 %v764, %v1023
  %v1158 = vmax.f32 %v765, %v1028
  %v1159 = vmax.f32 %v766, %v1031
  %v1160 = vmax.f32 %v767, %v1036
  %v1161 = vmax.f32 %v768, %v1039
  %v1162 = vmax.f32 %v769, %v1044
  %v1163 = vmax.f32 %v770, %v1047
  %v1164 = vmax.f32 %v771, %v1052
  %v1165 = vmax.f32 %v772, %v1055
  %v1166 = vmax.f32 %v773, %v1060
  %v1167 = vmax.f32 %v774, %v1063
  %v1168 = vmax.f32 %v775, %v1068
  %v1169 = vmax.f32 %v776, %v1071
  %v1170 = vmax.f32 %v777, %v1076
  %v1171 = vmax.f32 %v778, %v1079
  %v1172 = vmax.f32 %v779, %v1084
  %v1173 = vmax.f32 %v780, %v1087
  %v1174 = vmax.f32 %v781, %v1092
  %v1175 = vmax.f32 %v782, %v1095
  %v1176 = vmax.f32 %v783, %v1100
  %v1177 = vmax.f32 %v784, %v1103
  %v1178 = vmax.f32 %v785, %v1108
  %v1179 = vmax.f32 %v786, %v1111
  %v1180 = vmax.f32 %v787, %v1116
  %v1181 = vmax.f32 %v788, %v1119
  %v1182 = vmax.f32 %v789, %v1124
  %v1183 = vmax.f32 %v790, %v1127
  %v1184 = vmax.f32 %v791, %v1132
  %v1185 = vmax.f32 %v792, %v1135
  %v1186 = vmax.f32 %v793, %v1140
  %v1187 = vmax.f32 %v794, %v1143
  %v1188 = vmax.f32 %v795, %v1148
  %v1189 = vmax.f32 %v796, %v1151
  %v1190 = vld [vmem:[%s3] sm:$0xf]
  %v1191 = vld [vmem:[%s3 + $0x4] sm:$0xf]
  %v1192 = vld [vmem:[%s3 + $0x8] sm:$0xf]
  %v1193 = vld [vmem:[%s3 + $0xc] sm:$0xf]
  %v1194 = vld [vmem:[%s3 + $0x10] sm:$0xf]
  %v1195 = vld [vmem:[%s3 + $0x14] sm:$0xf]
  %v1196 = vld [vmem:[%s3 + $0x18] sm:$0xf]
  %v1197 = vld [vmem:[%s3 + $0x1c] sm:$0xf]
  %v1198 = vld [vmem:[%s3 + $0x20] sm:$0xf]
  %v1199 = vld [vmem:[%s3 + $0x24] sm:$0xf]
  %v1200 = vld [vmem:[%s3 + $0x28] sm:$0xf]
  %v1201 = vld [vmem:[%s3 + $0x2c] sm:$0xf]
  %v1202 = vld [vmem:[%s3 + $0x30] sm:$0xf]
  %v1203 = vld [vmem:[%s3 + $0x34] sm:$0xf]
  %v1204 = vld [vmem:[%s3 + $0x38] sm:$0xf]
  %v1205 = vld [vmem:[%s3 + $0x3c] sm:$0xf]
  %v1206 = vld [vmem:[%s3 + $0x40] sm:$0xf]
  %v1207 = vld [vmem:[%s3 + $0x44] sm:$0xf]
  %v1208 = vld [vmem:[%s3 + $0x48] sm:$0xf]
  %v1209 = vld [vmem:[%s3 + $0x4c] sm:$0xf]
  %v1210 = vld [vmem:[%s3 + $0x50] sm:$0xf]
  %v1211 = vld [vmem:[%s3 + $0x54] sm:$0xf]
  %v1212 = vld [vmem:[%s3 + $0x58] sm:$0xf]
  %v1213 = vld [vmem:[%s3 + $0x5c] sm:$0xf]
  %v1214 = vld [vmem:[%s3 + $0x60] sm:$0xf]
  %v1215 = vld [vmem:[%s3 + $0x64] sm:$0xf]
  %v1216 = vld [vmem:[%s3 + $0x68] sm:$0xf]
  %v1217 = vld [vmem:[%s3 + $0x6c] sm:$0xf]
  %v1218 = vld [vmem:[%s3 + $0x70] sm:$0xf]
  %v1219 = vld [vmem:[%s3 + $0x74] sm:$0xf]
  %v1220 = vld [vmem:[%s3 + $0x78] sm:$0xf]
  %v1221 = vld [vmem:[%s3 + $0x7c] sm:$0xf]
  %v1222 = vld [vmem:[%s3 + $0x80] sm:$0xf]
  %v1223 = vld [vmem:[%s3 + $0x84] sm:$0xf]
  %v1224 = vld [vmem:[%s3 + $0x88] sm:$0xf]
  %v1225 = vld [vmem:[%s3 + $0x8c] sm:$0xf]
  %v1262 = vunpack.c.l.b16 %v1190
  %v1263 = vunpack.c.l.b16 %v1191
  %v1264 = vunpack.c.l.b16 %v1192
  %v1265 = vunpack.c.l.b16 %v1193
  %v1266 = vunpack.c.l.b16 %v1194
  %v1267 = vunpack.c.l.b16 %v1195
  %v1268 = vunpack.c.l.b16 %v1196
  %v1269 = vunpack.c.l.b16 %v1197
  %v1270 = vunpack.c.l.b16 %v1198
  %v1271 = vunpack.c.l.b16 %v1199
  %v1272 = vunpack.c.l.b16 %v1200
  %v1273 = vunpack.c.l.b16 %v1201
  %v1274 = vunpack.c.l.b16 %v1202
  %v1275 = vunpack.c.l.b16 %v1203
  %v1276 = vunpack.c.l.b16 %v1204
  %v1277 = vunpack.c.l.b16 %v1205
  %v1278 = vunpack.c.l.b16 %v1206
  %v1279 = vunpack.c.l.b16 %v1207
  %v1280 = vunpack.c.l.b16 %v1208
  %v1281 = vunpack.c.l.b16 %v1209
  %v1282 = vunpack.c.l.b16 %v1210
  %v1283 = vunpack.c.l.b16 %v1211
  %v1284 = vunpack.c.l.b16 %v1212
  %v1285 = vunpack.c.l.b16 %v1213
  %v1286 = vunpack.c.l.b16 %v1214
  %v1287 = vunpack.c.l.b16 %v1215
  %v1288 = vunpack.c.l.b16 %v1216
  %v1289 = vunpack.c.l.b16 %v1217
  %v1290 = vunpack.c.l.b16 %v1218
  %v1291 = vunpack.c.l.b16 %v1219
  %v1292 = vunpack.c.l.b16 %v1220
  %v1293 = vunpack.c.l.b16 %v1221
  %v1294 = vunpack.c.l.b16 %v1222
  %v1295 = vunpack.c.l.b16 %v1223
  %v1296 = vunpack.c.l.b16 %v1224
  %v1297 = vunpack.c.l.b16 %v1225
  %v1298 = vpack.c.b16 %v1263, %v1262
  %v1299 = vpack.c.b16 %v1265, %v1264
  %v1300 = vpack.c.b16 %v1267, %v1266
  %v1301 = vpack.c.b16 %v1269, %v1268
  %v1302 = vpack.c.b16 %v1271, %v1270
  %v1303 = vpack.c.b16 %v1273, %v1272
  %v1304 = vpack.c.b16 %v1275, %v1274
  %v1305 = vpack.c.b16 %v1277, %v1276
  %v1306 = vpack.c.b16 %v1279, %v1278
  %v1307 = vpack.c.b16 %v1281, %v1280
  %v1308 = vpack.c.b16 %v1283, %v1282
  %v1309 = vpack.c.b16 %v1285, %v1284
  %v1310 = vpack.c.b16 %v1287, %v1286
  %v1311 = vpack.c.b16 %v1289, %v1288
  %v1312 = vpack.c.b16 %v1291, %v1290
  %v1313 = vpack.c.b16 %v1293, %v1292
  %v1314 = vpack.c.b16 %v1295, %v1294
  %v1315 = vpack.c.b16 %v1297, %v1296
  %v1317 = vsel %vm165, %v1298, 0
  %v1320 = vsel %vm165, %v1299, 0
  %v1323 = vsel %vm165, %v1300, 0
  %v1326 = vsel %vm165, %v1301, 0
  %v1329 = vsel %vm165, %v1302, 0
  %v1332 = vsel %vm165, %v1303, 0
  %v1335 = vsel %vm165, %v1304, 0
  %v1338 = vsel %vm165, %v1305, 0
  %v1341 = vsel %vm165, %v1306, 0
  %v1344 = vsel %vm165, %v1307, 0
  %v1347 = vsel %vm165, %v1308, 0
  %v1350 = vsel %vm165, %v1309, 0
  %v1353 = vsel %vm165, %v1310, 0
  %v1356 = vsel %vm165, %v1311, 0
  %v1359 = vsel %vm165, %v1312, 0
  %v1362 = vsel %vm165, %v1313, 0
  %v1365 = vsel %vm165, %v1314, 0
  %v1368 = vsel %vm165, %v1315, 0
  %1370 = vmatprep.subr.bf16.mxu0 0
  %1371 = vmatpush1.bf16.msra.mxu0 %v162
  %1372 = vmatprep.subr.bf16.mxu0 0
  %1373 = vmatpush1.bf16.msra.mxu0 %v225
  %1374 = vmatprep.subr.bf16.mxu0 0
  %1375 = vmatpush1.bf16.msra.mxu0 0
  %1376 = vmatprep.subr.bf16.mxu0 0
  %1377 = vmatpush1.bf16.msra.mxu0 0
  %1378 = vmatprep.subr.bf16.mxu0 0
  %1379 = vmatpush1.bf16.msra.mxu0 0
  %1380 = vmatprep.subr.bf16.mxu0 0
  %1381 = vmatpush1.bf16.msra.mxu0 0
  %1382 = vmatprep.subr.bf16.mxu0 0
  %1383 = vmatpush1.bf16.msra.mxu0 0
  %1384 = vmatprep.subr.bf16.mxu0 0
  %1385 = vmatpush1.bf16.msra.mxu0 0
  %1386 = vmatprep.subr.bf16.mxu0 0
  %1387 = vmatpush1.bf16.msra.mxu0 0
  %1388 = vmatprep.subr.bf16.mxu0 0
  %1389 = vmatpush1.bf16.msra.mxu0 0
  %1390 = vmatprep.subr.bf16.mxu0 0
  %1391 = vmatpush1.bf16.msra.mxu0 0
  %1392 = vmatprep.subr.bf16.mxu0 0
  %1393 = vmatpush1.bf16.msra.mxu0 0
  %1394 = vmatprep.subr.bf16.mxu0 0
  %1395 = vmatpush1.bf16.msra.mxu0 0
  %1396 = vmatprep.subr.bf16.mxu0 0
  %1397 = vmatpush1.bf16.msra.mxu0 0
  %1398 = vmatprep.subr.bf16.mxu0 0
  %1399 = vmatpush1.bf16.msra.mxu0 0
  %1400 = vmatprep.subr.bf16.mxu0 0
  %1401 = vmatpush1.bf16.msra.mxu0 0
  %1402 = vmatprep.mubr.bf16.mxu0 0
  %1403 = vmatmul.mubr.bf16.gmra.mrb[0].mxu0 %v1317
  %v1404 = vpop.f32.mrb[0].mxu0
  %v1405 = vadd.f32 0.0, %v1404
  %v1406 = vpop.f32.mrb[0].mxu0
  %v1407 = vpop.f32.mrb[0].mxu0
  %v1408 = vadd.f32 0.0, %v1407
  %v1409 = vpop.f32.mrb[0].mxu0
  %1410 = vmatprep.mubr.bf16.mxu0 0
  %1411 = vmatmul.mubr.bf16.gmra.mrb[0].mxu0 %v1320
  %v1412 = vpop.f32.mrb[0].mxu0
  %v1413 = vadd.f32 0.0, %v1412
  %v1414 = vpop.f32.mrb[0].mxu0
  %v1415 = vpop.f32.mrb[0].mxu0
  %v1416 = vadd.f32 0.0, %v1415
  %v1417 = vpop.f32.mrb[0].mxu0
  %1418 = vmatprep.mubr.bf16.mxu0 0
  %1419 = vmatmul.mubr.bf16.gmra.mrb[0].mxu0 %v1323
  %v1420 = vpop.f32.mrb[0].mxu0
  %v1421 = vadd.f32 0.0, %v1420
  %v1422 = vpop.f32.mrb[0].mxu0
  %v1423 = vpop.f32.mrb[0].mxu0
  %v1424 = vadd.f32 0.0, %v1423
  %v1425 = vpop.f32.mrb[0].mxu0
  %1426 = vmatprep.mubr.bf16.mxu0 0
  %1427 = vmatmul.mubr.bf16.gmra.mrb[0].mxu0 %v1326
  %v1428 = vpop.f32.mrb[0].mxu0
  %v1429 = vadd.f32 0.0, %v1428
  %v1430 = vpop.f32.mrb[0].mxu0
  %v1431 = vpop.f32.mrb[0].mxu0
  %v1432 = vadd.f32 0.0, %v1431
  %v1433 = vpop.f32.mrb[0].mxu0
  %1434 = vmatprep.mubr.bf16.mxu0 0
  %1435 = vmatmul.mubr.bf16.gmra.mrb[0].mxu0 %v1329
  %v1436 = vpop.f32.mrb[0].mxu0
  %v1437 = vadd.f32 0.0, %v1436
  %v1438 = vpop.f32.mrb[0].mxu0
  %v1439 = vpop.f32.mrb[0].mxu0
  %v1440 = vadd.f32 0.0, %v1439
  %v1441 = vpop.f32.mrb[0].mxu0
  %1442 = vmatprep.mubr.bf16.mxu0 0
  %1443 = vmatmul.mubr.bf16.gmra.mrb[0].mxu0 %v1332
  %v1444 = vpop.f32.mrb[0].mxu0
  %v1445 = vadd.f32 0.0, %v1444
  %v1446 = vpop.f32.mrb[0].mxu0
  %v1447 = vpop.f32.mrb[0].mxu0
  %v1448 = vadd.f32 0.0, %v1447
  %v1449 = vpop.f32.mrb[0].mxu0
  %1450 = vmatprep.mubr.bf16.mxu0 0
  %1451 = vmatmul.mubr.bf16.gmra.mrb[0].mxu0 %v1335
  %v1452 = vpop.f32.mrb[0].mxu0
  %v1453 = vadd.f32 0.0, %v1452
  %v1454 = vpop.f32.mrb[0].mxu0
  %v1455 = vpop.f32.mrb[0].mxu0
  %v1456 = vadd.f32 0.0, %v1455
  %v1457 = vpop.f32.mrb[0].mxu0
  %1458 = vmatprep.mubr.bf16.mxu0 0
  %1459 = vmatmul.mubr.bf16.gmra.mrb[0].mxu0 %v1338
  %v1460 = vpop.f32.mrb[0].mxu0
  %v1461 = vadd.f32 0.0, %v1460
  %v1462 = vpop.f32.mrb[0].mxu0
  %v1463 = vpop.f32.mrb[0].mxu0
  %v1464 = vadd.f32 0.0, %v1463
  %v1465 = vpop.f32.mrb[0].mxu0
  %1466 = vmatprep.mubr.bf16.mxu0 0
  %1467 = vmatmul.mubr.bf16.gmra.mrb[0].mxu0 %v1341
  %v1468 = vpop.f32.mrb[0].mxu0
  %v1469 = vadd.f32 0.0, %v1468
  %v1470 = vpop.f32.mrb[0].mxu0
  %v1471 = vpop.f32.mrb[0].mxu0
  %v1472 = vadd.f32 0.0, %v1471
  %v1473 = vpop.f32.mrb[0].mxu0
  %1474 = vmatprep.mubr.bf16.mxu0 0
  %1475 = vmatmul.mubr.bf16.gmra.mrb[0].mxu0 %v1344
  %v1476 = vpop.f32.mrb[0].mxu0
  %v1477 = vadd.f32 0.0, %v1476
  %v1478 = vpop.f32.mrb[0].mxu0
  %v1479 = vpop.f32.mrb[0].mxu0
  %v1480 = vadd.f32 0.0, %v1479
  %v1481 = vpop.f32.mrb[0].mxu0
  %1482 = vmatprep.mubr.bf16.mxu0 0
  %1483 = vmatmul.mubr.bf16.gmra.mrb[0].mxu0 %v1347
  %v1484 = vpop.f32.mrb[0].mxu0
  %v1485 = vadd.f32 0.0, %v1484
  %v1486 = vpop.f32.mrb[0].mxu0
  %v1487 = vpop.f32.mrb[0].mxu0
  %v1488 = vadd.f32 0.0, %v1487
  %v1489 = vpop.f32.mrb[0].mxu0
  %1490 = vmatprep.mubr.bf16.mxu0 0
  %1491 = vmatmul.mubr.bf16.gmra.mrb[0].mxu0 %v1350
  %v1492 = vpop.f32.mrb[0].mxu0
  %v1493 = vadd.f32 0.0, %v1492
  %v1494 = vpop.f32.mrb[0].mxu0
  %v1495 = vpop.f32.mrb[0].mxu0
  %v1496 = vadd.f32 0.0, %v1495
  %v1497 = vpop.f32.mrb[0].mxu0
  %1498 = vmatprep.mubr.bf16.mxu0 0
  %1499 = vmatmul.mubr.bf16.gmra.mrb[0].mxu0 %v1353
  %v1500 = vpop.f32.mrb[0].mxu0
  %v1501 = vadd.f32 0.0, %v1500
  %v1502 = vpop.f32.mrb[0].mxu0
  %v1503 = vpop.f32.mrb[0].mxu0
  %v1504 = vadd.f32 0.0, %v1503
  %v1505 = vpop.f32.mrb[0].mxu0
  %1506 = vmatprep.mubr.bf16.mxu0 0
  %1507 = vmatmul.mubr.bf16.gmra.mrb[0].mxu0 %v1356
  %v1508 = vpop.f32.mrb[0].mxu0
  %v1509 = vadd.f32 0.0, %v1508
  %v1510 = vpop.f32.mrb[0].mxu0
  %v1511 = vpop.f32.mrb[0].mxu0
  %v1512 = vadd.f32 0.0, %v1511
  %v1513 = vpop.f32.mrb[0].mxu0
  %1514 = vmatprep.mubr.bf16.mxu0 0
  %1515 = vmatmul.mubr.bf16.gmra.mrb[0].mxu0 %v1359
  %v1516 = vpop.f32.mrb[0].mxu0
  %v1517 = vadd.f32 0.0, %v1516
  %v1518 = vpop.f32.mrb[0].mxu0
  %v1519 = vpop.f32.mrb[0].mxu0
  %v1520 = vadd.f32 0.0, %v1519
  %v1521 = vpop.f32.mrb[0].mxu0
  %1522 = vmatprep.mubr.bf16.mxu0 0
  %1523 = vmatmul.mubr.bf16.gmra.mrb[0].mxu0 %v1362
  %v1524 = vpop.f32.mrb[0].mxu0
  %v1525 = vadd.f32 0.0, %v1524
  %v1526 = vpop.f32.mrb[0].mxu0
  %v1527 = vpop.f32.mrb[0].mxu0
  %v1528 = vadd.f32 0.0, %v1527
  %v1529 = vpop.f32.mrb[0].mxu0
  %1530 = vmatprep.mubr.bf16.mxu0 0
  %1531 = vmatmul.mubr.bf16.gmra.mrb[0].mxu0 %v1365
  %v1532 = vpop.f32.mrb[0].mxu0
  %v1533 = vadd.f32 0.0, %v1532
  %v1534 = vpop.f32.mrb[0].mxu0
  %v1535 = vpop.f32.mrb[0].mxu0
  %v1536 = vadd.f32 0.0, %v1535
  %v1537 = vpop.f32.mrb[0].mxu0
  %1538 = vmatprep.mubr.bf16.mxu0 0
  %1539 = vmatmul.mubr.bf16.gmra.mrb[0].mxu0 %v1368
  %v1540 = vpop.f32.mrb[0].mxu0
  %v1541 = vadd.f32 0.0, %v1540
  %v1542 = vpop.f32.mrb[0].mxu0
  %v1543 = vpop.f32.mrb[0].mxu0
  %v1544 = vadd.f32 0.0, %v1543
  %v1545 = vpop.f32.mrb[0].mxu0
  %1546 = vdwg.mxu0
  %v1547 = vmax.f32 %v1154, %v1405
  %v1548 = vmax.f32 %v1155, %v1408
  %v1549 = vmax.f32 %v1156, %v1413
  %v1550 = vmax.f32 %v1157, %v1416
  %v1551 = vmax.f32 %v1158, %v1421
  %v1552 = vmax.f32 %v1159, %v1424
  %v1553 = vmax.f32 %v1160, %v1429
  %v1554 = vmax.f32 %v1161, %v1432
  %v1555 = vmax.f32 %v1162, %v1437
  %v1556 = vmax.f32 %v1163, %v1440
  %v1557 = vmax.f32 %v1164, %v1445
  %v1558 = vmax.f32 %v1165, %v1448
  %v1559 = vmax.f32 %v1166, %v1453
  %v1560 = vmax.f32 %v1167, %v1456
  %v1561 = vmax.f32 %v1168, %v1461
  %v1562 = vmax.f32 %v1169, %v1464
  %v1563 = vmax.f32 %v1170, %v1469
  %v1564 = vmax.f32 %v1171, %v1472
  %v1565 = vmax.f32 %v1172, %v1477
  %v1566 = vmax.f32 %v1173, %v1480
  %v1567 = vmax.f32 %v1174, %v1485
  %v1568 = vmax.f32 %v1175, %v1488
  %v1569 = vmax.f32 %v1176, %v1493
  %v1570 = vmax.f32 %v1177, %v1496
  %v1571 = vmax.f32 %v1178, %v1501
  %v1572 = vmax.f32 %v1179, %v1504
  %v1573 = vmax.f32 %v1180, %v1509
  %v1574 = vmax.f32 %v1181, %v1512
  %v1575 = vmax.f32 %v1182, %v1517
  %v1576 = vmax.f32 %v1183, %v1520
  %v1577 = vmax.f32 %v1184, %v1525
  %v1578 = vmax.f32 %v1185, %v1528
  %v1579 = vmax.f32 %v1186, %v1533
  %v1580 = vmax.f32 %v1187, %v1536
  %v1581 = vmax.f32 %v1188, %v1541
  %v1582 = vmax.f32 %v1189, %v1544
  %v1583 = vld [vmem:[%s5] sm:$0x1]
  %v1585 = vlaneseq
  %v1586 = vshrl.u32 %v1585, 7
  %v1587 = vsub.s32 0, %v1586
  %v1588 = vrot.slane %v1583, %v1587
  %v1590 = vadd.f32 %v1547, %v1588
  %v1591 = vadd.f32 %v1548, %v1588
  %v1592 = vadd.f32 %v1549, %v1588
  %v1593 = vadd.f32 %v1550, %v1588
  %v1594 = vadd.f32 %v1551, %v1588
  %v1595 = vadd.f32 %v1552, %v1588
  %v1596 = vadd.f32 %v1553, %v1588
  %v1597 = vadd.f32 %v1554, %v1588
  %v1598 = vadd.f32 %v1555, %v1588
  %v1599 = vadd.f32 %v1556, %v1588
  %v1600 = vadd.f32 %v1557, %v1588
  %v1601 = vadd.f32 %v1558, %v1588
  %v1602 = vadd.f32 %v1559, %v1588
  %v1603 = vadd.f32 %v1560, %v1588
  %v1604 = vadd.f32 %v1561, %v1588
  %v1605 = vadd.f32 %v1562, %v1588
  %v1606 = vadd.f32 %v1563, %v1588
  %v1607 = vadd.f32 %v1564, %v1588
  %v1608 = vadd.f32 %v1565, %v1588
  %v1609 = vadd.f32 %v1566, %v1588
  %v1610 = vadd.f32 %v1567, %v1588
  %v1611 = vadd.f32 %v1568, %v1588
  %v1612 = vadd.f32 %v1569, %v1588
  %v1613 = vadd.f32 %v1570, %v1588
  %v1614 = vadd.f32 %v1571, %v1588
  %v1615 = vadd.f32 %v1572, %v1588
  %v1616 = vadd.f32 %v1573, %v1588
  %v1617 = vadd.f32 %v1574, %v1588
  %v1618 = vadd.f32 %v1575, %v1588
  %v1619 = vadd.f32 %v1576, %v1588
  %v1620 = vadd.f32 %v1577, %v1588
  %v1621 = vadd.f32 %v1578, %v1588
  %v1622 = vadd.f32 %v1579, %v1588
  %v1623 = vadd.f32 %v1580, %v1588
  %v1624 = vadd.f32 %v1581, %v1588
  %v1625 = vadd.f32 %v1582, %v1588
  %v1626 = vmax.f32 %v1590, 0.0
  %v1627 = vmax.f32 %v1591, 0.0
  %v1628 = vmax.f32 %v1592, 0.0
  %v1629 = vmax.f32 %v1593, 0.0
  %v1630 = vmax.f32 %v1594, 0.0
  %v1631 = vmax.f32 %v1595, 0.0
  %v1632 = vmax.f32 %v1596, 0.0
  %v1633 = vmax.f32 %v1597, 0.0
  %v1634 = vmax.f32 %v1598, 0.0
  %v1635 = vmax.f32 %v1599, 0.0
  %v1636 = vmax.f32 %v1600, 0.0
  %v1637 = vmax.f32 %v1601, 0.0
  %v1638 = vmax.f32 %v1602, 0.0
  %v1639 = vmax.f32 %v1603, 0.0
  %v1640 = vmax.f32 %v1604, 0.0
  %v1641 = vmax.f32 %v1605, 0.0
  %v1642 = vmax.f32 %v1606, 0.0
  %v1643 = vmax.f32 %v1607, 0.0
  %v1644 = vmax.f32 %v1608, 0.0
  %v1645 = vmax.f32 %v1609, 0.0
  %v1646 = vmax.f32 %v1610, 0.0
  %v1647 = vmax.f32 %v1611, 0.0
  %v1648 = vmax.f32 %v1612, 0.0
  %v1649 = vmax.f32 %v1613, 0.0
  %v1650 = vmax.f32 %v1614, 0.0
  %v1651 = vmax.f32 %v1615, 0.0
  %v1652 = vmax.f32 %v1616, 0.0
  %v1653 = vmax.f32 %v1617, 0.0
  %v1654 = vmax.f32 %v1618, 0.0
  %v1655 = vmax.f32 %v1619, 0.0
  %v1656 = vmax.f32 %v1620, 0.0
  %v1657 = vmax.f32 %v1621, 0.0
  %v1658 = vmax.f32 %v1622, 0.0
  %v1659 = vmax.f32 %v1623, 0.0
  %v1660 = vmax.f32 %v1624, 0.0
  %v1661 = vmax.f32 %v1625, 0.0
  %v1662 = vpack.c.bf16 %v1627, %v1626
  %v1663 = vpack.c.bf16 %v1629, %v1628
  %v1664 = vpack.c.bf16 %v1631, %v1630
  %v1665 = vpack.c.bf16 %v1633, %v1632
  %v1666 = vpack.c.bf16 %v1635, %v1634
  %v1667 = vpack.c.bf16 %v1637, %v1636
  %v1668 = vpack.c.bf16 %v1639, %v1638
  %v1669 = vpack.c.bf16 %v1641, %v1640
  %v1670 = vpack.c.bf16 %v1643, %v1642
  %v1671 = vpack.c.bf16 %v1645, %v1644
  %v1672 = vpack.c.bf16 %v1647, %v1646
  %v1673 = vpack.c.bf16 %v1649, %v1648
  %v1674 = vpack.c.bf16 %v1651, %v1650
  %v1675 = vpack.c.bf16 %v1653, %v1652
  %v1676 = vpack.c.bf16 %v1655, %v1654
  %v1677 = vpack.c.bf16 %v1657, %v1656
  %v1678 = vpack.c.bf16 %v1659, %v1658
  %v1679 = vpack.c.bf16 %v1661, %v1660
  %v1698 = vunpack.c.l.b16 %v1662
  %v1699 = vunpack.c.h.b16 %v1662
  %v1700 = vunpack.c.l.b16 %v1663
  %v1701 = vunpack.c.h.b16 %v1663
  %v1702 = vunpack.c.l.b16 %v1664
  %v1703 = vunpack.c.h.b16 %v1664
  %v1704 = vunpack.c.l.b16 %v1665
  %v1705 = vunpack.c.h.b16 %v1665
  %v1706 = vunpack.c.l.b16 %v1666
  %v1707 = vunpack.c.h.b16 %v1666
  %v1708 = vunpack.c.l.b16 %v1667
  %v1709 = vunpack.c.h.b16 %v1667
  %v1710 = vunpack.c.l.b16 %v1668
  %v1711 = vunpack.c.h.b16 %v1668
  %v1712 = vunpack.c.l.b16 %v1669
  %v1713 = vunpack.c.h.b16 %v1669
  %v1714 = vunpack.c.l.b16 %v1670
  %v1715 = vunpack.c.h.b16 %v1670
  %v1716 = vunpack.c.l.b16 %v1671
  %v1717 = vunpack.c.h.b16 %v1671
  %v1718 = vunpack.c.l.b16 %v1672
  %v1719 = vunpack.c.h.b16 %v1672
  %v1720 = vunpack.c.l.b16 %v1673
  %v1721 = vunpack.c.h.b16 %v1673
  %v1722 = vunpack.c.l.b16 %v1674
  %v1723 = vunpack.c.h.b16 %v1674
  %v1724 = vunpack.c.l.b16 %v1675
  %v1725 = vunpack.c.h.b16 %v1675
  %v1726 = vunpack.c.l.b16 %v1676
  %v1727 = vunpack.c.h.b16 %v1676
  %v1728 = vunpack.c.l.b16 %v1677
  %v1729 = vunpack.c.h.b16 %v1677
  %v1730 = vunpack.c.l.b16 %v1678
  %v1731 = vunpack.c.h.b16 %v1678
  %v1732 = vunpack.c.l.b16 %v1679
  %v1733 = vunpack.c.h.b16 %v1679
  %v1734 = vpack.c.b16 %v1698, %v1698
  %v1735 = vpack.c.b16 %v1699, %v1699
  %v1736 = vpack.c.b16 %v1700, %v1700
  %v1737 = vpack.c.b16 %v1701, %v1701
  %v1738 = vpack.c.b16 %v1702, %v1702
  %v1739 = vpack.c.b16 %v1703, %v1703
  %v1740 = vpack.c.b16 %v1704, %v1704
  %v1741 = vpack.c.b16 %v1705, %v1705
  %v1742 = vpack.c.b16 %v1706, %v1706
  %v1743 = vpack.c.b16 %v1707, %v1707
  %v1744 = vpack.c.b16 %v1708, %v1708
  %v1745 = vpack.c.b16 %v1709, %v1709
  %v1746 = vpack.c.b16 %v1710, %v1710
  %v1747 = vpack.c.b16 %v1711, %v1711
  %v1748 = vpack.c.b16 %v1712, %v1712
  %v1749 = vpack.c.b16 %v1713, %v1713
  %v1750 = vpack.c.b16 %v1714, %v1714
  %v1751 = vpack.c.b16 %v1715, %v1715
  %v1752 = vpack.c.b16 %v1716, %v1716
  %v1753 = vpack.c.b16 %v1717, %v1717
  %v1754 = vpack.c.b16 %v1718, %v1718
  %v1755 = vpack.c.b16 %v1719, %v1719
  %v1756 = vpack.c.b16 %v1720, %v1720
  %v1757 = vpack.c.b16 %v1721, %v1721
  %v1758 = vpack.c.b16 %v1722, %v1722
  %v1759 = vpack.c.b16 %v1723, %v1723
  %v1760 = vpack.c.b16 %v1724, %v1724
  %v1761 = vpack.c.b16 %v1725, %v1725
  %v1762 = vpack.c.b16 %v1726, %v1726
  %v1763 = vpack.c.b16 %v1727, %v1727
  %v1764 = vpack.c.b16 %v1728, %v1728
  %v1765 = vpack.c.b16 %v1729, %v1729
  %v1766 = vpack.c.b16 %v1730, %v1730
  %v1767 = vpack.c.b16 %v1731, %v1731
  %v1768 = vpack.c.b16 %v1732, %v1732
  %v1769 = vpack.c.b16 %v1733, %v1733
  %vm1806 = vcmask 76800
  %1807 = vst.msk [vmem:[%s6] sm:$0xf] %vm1806, %v1734
  %1808 = vst.msk [vmem:[%s6 + $0x4] sm:$0xf] %vm1806, %v1735
  %1809 = vst.msk [vmem:[%s6 + $0x8] sm:$0xf] %vm1806, %v1736
  %1810 = vst.msk [vmem:[%s6 + $0xc] sm:$0xf] %vm1806, %v1737
  %1811 = vst.msk [vmem:[%s6 + $0x10] sm:$0xf] %vm1806, %v1738
  %1812 = vst.msk [vmem:[%s6 + $0x14] sm:$0xf] %vm1806, %v1739
  %1813 = vst.msk [vmem:[%s6 + $0x18] sm:$0xf] %vm1806, %v1740
  %1814 = vst.msk [vmem:[%s6 + $0x1c] sm:$0xf] %vm1806, %v1741
  %1815 = vst.msk [vmem:[%s6 + $0x20] sm:$0xf] %vm1806, %v1742
  %1816 = vst.msk [vmem:[%s6 + $0x24] sm:$0xf] %vm1806, %v1743
  %1817 = vst.msk [vmem:[%s6 + $0x28] sm:$0xf] %vm1806, %v1744
  %1818 = vst.msk [vmem:[%s6 + $0x2c] sm:$0xf] %vm1806, %v1745
  %1819 = vst.msk [vmem:[%s6 + $0x30] sm:$0xf] %vm1806, %v1746
  %1820 = vst.msk [vmem:[%s6 + $0x34] sm:$0xf] %vm1806, %v1747
  %1821 = vst.msk [vmem:[%s6 + $0x38] sm:$0xf] %vm1806, %v1748
  %1822 = vst.msk [vmem:[%s6 + $0x3c] sm:$0xf] %vm1806, %v1749
  %1823 = vst.msk [vmem:[%s6 + $0x40] sm:$0xf] %vm1806, %v1750
  %1824 = vst.msk [vmem:[%s6 + $0x44] sm:$0xf] %vm1806, %v1751
  %1825 = vst.msk [vmem:[%s6 + $0x48] sm:$0xf] %vm1806, %v1752
  %1826 = vst.msk [vmem:[%s6 + $0x4c] sm:$0xf] %vm1806, %v1753
  %1827 = vst.msk [vmem:[%s6 + $0x50] sm:$0xf] %vm1806, %v1754
  %1828 = vst.msk [vmem:[%s6 + $0x54] sm:$0xf] %vm1806, %v1755
  %1829 = vst.msk [vmem:[%s6 + $0x58] sm:$0xf] %vm1806, %v1756
  %1830 = vst.msk [vmem:[%s6 + $0x5c] sm:$0xf] %vm1806, %v1757
  %1831 = vst.msk [vmem:[%s6 + $0x60] sm:$0xf] %vm1806, %v1758
  %1832 = vst.msk [vmem:[%s6 + $0x64] sm:$0xf] %vm1806, %v1759
  %1833 = vst.msk [vmem:[%s6 + $0x68] sm:$0xf] %vm1806, %v1760
  %1834 = vst.msk [vmem:[%s6 + $0x6c] sm:$0xf] %vm1806, %v1761
  %1835 = vst.msk [vmem:[%s6 + $0x70] sm:$0xf] %vm1806, %v1762
  %1836 = vst.msk [vmem:[%s6 + $0x74] sm:$0xf] %vm1806, %v1763
  %1837 = vst.msk [vmem:[%s6 + $0x78] sm:$0xf] %vm1806, %v1764
  %1838 = vst.msk [vmem:[%s6 + $0x7c] sm:$0xf] %vm1806, %v1765
  %1839 = vst.msk [vmem:[%s6 + $0x80] sm:$0xf] %vm1806, %v1766
  %1840 = vst.msk [vmem:[%s6 + $0x84] sm:$0xf] %vm1806, %v1767
  %1841 = vst.msk [vmem:[%s6 + $0x88] sm:$0xf] %vm1806, %v1768
  %1842 = vst.msk [vmem:[%s6 + $0x8c] sm:$0xf] %vm1806, %v1769
  // Predicated region
  $region26: #{convneta_forward.3} parent=0 // pred_check
    _
  $region27: #{convneta_forward.3} parent=0 // pred_check_branch
    %1844 = sbr.rel (0) target = $region29
  $region28: #{convneta_forward.3} parent=0 // pred_region
    _
  $region29: #{convneta_forward.3} parent=0 // pred_fallthru
    _
  // Predicated region
  $region30: #{convneta_forward.3} parent=0 // pred_check
    _
  $region31: #{convneta_forward.3} parent=0 // pred_check_branch
    %1846 = sbr.rel (0) target = $region33
  $region32: #{convneta_forward.3} parent=0 // pred_region
    _
  $region33: #{convneta_forward.3} parent=0 // pred_fallthru
    _

// kernel: convneta_forward.4
$region0: #{convneta_forward.4}
  #allocation0 [shape = 'u32[]', space=smem, size = 0x4, offset = 0x4, fixed_abs, tag = 'smem constant byte address 0x4 - core index']
  #allocation1 [shape = 'u32[144,128]{1,0:T(1,128)}', space=vmem, size = 0x12000, scoped, tag = 'internal scratch']
  %s0 = inlined_call_operand.vmem [shape: bf16[32,250], index: 0, kind: input, shape index: {}]
  %s1 = inlined_call_operand.vmem [shape: bf16[32,250], index: 1, kind: input, shape index: {}]
  %s2 = inlined_call_operand.vmem [shape: bf16[32,250], index: 2, kind: input, shape index: {}]
  %s3 = inlined_call_operand.vmem [shape: bf16[32,250], index: 3, kind: input, shape index: {}]
  %s4 = inlined_call_operand.vmem [shape: bf16[250,20], index: 4, kind: input, shape index: {}]
  %s5 = inlined_call_operand.vmem [shape: f32[1,20], index: 5, kind: input, shape index: {}]
  %s6 = inlined_call_operand.vmem [shape: bf16[32,20], index: 6, kind: output, shape index: {}]
  %s7 = sld [smem:[#allocation0]]
  $region34: #{convneta_forward.4} parent=0
    _
  %s9 = ssub.s32 1, %s7
  %s10 = scalar_select 0, %s9, %s7
  // Predicated region
  $region2: #{convneta_forward.4} parent=0 // pred_check
    _
  $region3: #{convneta_forward.4} parent=0 // pred_check_branch
    %12 = sbr.rel (0) target = $region5
  $region4: #{convneta_forward.4} parent=0 // pred_region
    _
  $region5: #{convneta_forward.4} parent=0 // pred_fallthru
    _
  // Predicated region
  $region6: #{convneta_forward.4} parent=0 // pred_check
    _
  $region7: #{convneta_forward.4} parent=0 // pred_check_branch
    %14 = sbr.rel (0) target = $region9
  $region8: #{convneta_forward.4} parent=0 // pred_region
    _
  $region9: #{convneta_forward.4} parent=0 // pred_fallthru
    _
  // Predicated region
  $region10: #{convneta_forward.4} parent=0 // pred_check
    _
  $region11: #{convneta_forward.4} parent=0 // pred_check_branch
    %16 = sbr.rel (0) target = $region13
  $region12: #{convneta_forward.4} parent=0 // pred_region
    _
  $region13: #{convneta_forward.4} parent=0 // pred_fallthru
    _
  // Predicated region
  $region14: #{convneta_forward.4} parent=0 // pred_check
    _
  $region15: #{convneta_forward.4} parent=0 // pred_check_branch
    %18 = sbr.rel (0) target = $region17
  $region16: #{convneta_forward.4} parent=0 // pred_region
    _
  $region17: #{convneta_forward.4} parent=0 // pred_fallthru
    _
  // Predicated region
  $region18: #{convneta_forward.4} parent=0 // pred_check
    _
  $region19: #{convneta_forward.4} parent=0 // pred_check_branch
    %20 = sbr.rel (0) target = $region21
  $region20: #{convneta_forward.4} parent=0 // pred_region
    _
  $region21: #{convneta_forward.4} parent=0 // pred_fallthru
    _
  // Predicated region
  $region22: #{convneta_forward.4} parent=0 // pred_check
    _
  $region23: #{convneta_forward.4} parent=0 // pred_check_branch
    %22 = sbr.rel (0) target = $region25
  $region24: #{convneta_forward.4} parent=0 // pred_region
    _
  $region25: #{convneta_forward.4} parent=0 // pred_fallthru
    _
  %v24 = vld [vmem:[%s4] sm:$0xf]
  %v25 = vld [vmem:[%s4 + $0x4] sm:$0xf]
  %v26 = vld [vmem:[%s4 + $0x8] sm:$0xf]
  %v27 = vld [vmem:[%s4 + $0xc] sm:$0xf]
  %v28 = vld [vmem:[%s4 + $0x10] sm:$0xf]
  %v29 = vld [vmem:[%s4 + $0x14] sm:$0xf]
  %v30 = vld [vmem:[%s4 + $0x18] sm:$0xf]
  %v31 = vld [vmem:[%s4 + $0x1c] sm:$0xf]
  %v32 = vld [vmem:[%s4 + $0x20] sm:$0xf]
  %v33 = vld [vmem:[%s4 + $0x24] sm:$0xf]
  %v34 = vld [vmem:[%s4 + $0x28] sm:$0xf]
  %v35 = vld [vmem:[%s4 + $0x2c] sm:$0xf]
  %v36 = vld [vmem:[%s4 + $0x30] sm:$0xf]
  %v37 = vld [vmem:[%s4 + $0x34] sm:$0xf]
  %v38 = vld [vmem:[%s4 + $0x38] sm:$0xf]
  %v39 = vld [vmem:[%s4 + $0x3c] sm:$0xf]
  %v40 = vld [vmem:[%s4 + $0x40] sm:$0xf]
  %v41 = vld [vmem:[%s4 + $0x44] sm:$0xf]
  %v42 = vld [vmem:[%s4 + $0x48] sm:$0xf]
  %v43 = vld [vmem:[%s4 + $0x4c] sm:$0xf]
  %v44 = vld [vmem:[%s4 + $0x50] sm:$0xf]
  %v45 = vld [vmem:[%s4 + $0x54] sm:$0xf]
  %v46 = vld [vmem:[%s4 + $0x58] sm:$0xf]
  %v47 = vld [vmem:[%s4 + $0x5c] sm:$0xf]
  %v48 = vld [vmem:[%s4 + $0x60] sm:$0xf]
  %v49 = vld [vmem:[%s4 + $0x64] sm:$0xf]
  %v50 = vld [vmem:[%s4 + $0x68] sm:$0xf]
  %v51 = vld [vmem:[%s4 + $0x6c] sm:$0xf]
  %v52 = vld [vmem:[%s4 + $0x70] sm:$0xf]
  %v53 = vld [vmem:[%s4 + $0x74] sm:$0xf]
  %v54 = vld [vmem:[%s4 + $0x78] sm:$0xf]
  %v55 = vld [vmem:[%s4 + $0x7c] sm:$0x1]
  %v56 = vld [vmem:[%s0] sm:$0xff]
  %v57 = vld [vmem:[%s0 + $0x8] sm:$0xff]
  %v58 = vld [vmem:[%s0 + $0x10] sm:$0xff]
  %v59 = vld [vmem:[%s0 + $0x18] sm:$0xff]
  %v64 = vunpack.c.l.b16 %v56
  %v65 = vunpack.c.h.b16 %v56
  %v66 = vunpack.c.l.b16 %v57
  %v67 = vunpack.c.h.b16 %v57
  %v68 = vunpack.c.l.b16 %v58
  %v69 = vunpack.c.h.b16 %v58
  %v70 = vunpack.c.l.b16 %v59
  %v71 = vunpack.c.h.b16 %v59
  %v72 = vpack.c.b16 %v66, %v64
  %v73 = vpack.c.b16 %v67, %v65
  %v74 = vpack.c.b16 %v70, %v68
  %v75 = vpack.c.b16 %v71, %v69
  %v110 = vunpack.c.l.b16 %v24
  %v111 = vunpack.c.l.b16 %v25
  %v112 = vunpack.c.l.b16 %v26
  %v113 = vunpack.c.l.b16 %v27
  %v114 = vunpack.c.l.b16 %v28
  %v115 = vunpack.c.l.b16 %v29
  %v116 = vunpack.c.l.b16 %v30
  %v117 = vunpack.c.l.b16 %v31
  %v118 = vunpack.c.l.b16 %v32
  %v119 = vunpack.c.l.b16 %v33
  %v120 = vunpack.c.l.b16 %v34
  %v121 = vunpack.c.l.b16 %v35
  %v122 = vunpack.c.l.b16 %v36
  %v123 = vunpack.c.l.b16 %v37
  %v124 = vunpack.c.l.b16 %v38
  %v125 = vunpack.c.l.b16 %v39
  %v126 = vunpack.c.l.b16 %v40
  %v127 = vunpack.c.l.b16 %v41
  %v128 = vunpack.c.l.b16 %v42
  %v129 = vunpack.c.l.b16 %v43
  %v130 = vunpack.c.l.b16 %v44
  %v131 = vunpack.c.l.b16 %v45
  %v132 = vunpack.c.l.b16 %v46
  %v133 = vunpack.c.l.b16 %v47
  %v134 = vunpack.c.l.b16 %v48
  %v135 = vunpack.c.l.b16 %v49
  %v136 = vunpack.c.l.b16 %v50
  %v137 = vunpack.c.l.b16 %v51
  %v138 = vunpack.c.l.b16 %v52
  %v139 = vunpack.c.l.b16 %v53
  %v140 = vunpack.c.l.b16 %v54
  %v141 = vunpack.c.l.b16 %v55
  %v142 = vpack.c.b16 %v111, %v110
  %v143 = vpack.c.b16 %v113, %v112
  %v144 = vpack.c.b16 %v115, %v114
  %v145 = vpack.c.b16 %v117, %v116
  %v146 = vpack.c.b16 %v119, %v118
  %v147 = vpack.c.b16 %v121, %v120
  %v148 = vpack.c.b16 %v123, %v122
  %v149 = vpack.c.b16 %v125, %v124
  %v150 = vpack.c.b16 %v127, %v126
  %v151 = vpack.c.b16 %v129, %v128
  %v152 = vpack.c.b16 %v131, %v130
  %v153 = vpack.c.b16 %v133, %v132
  %v154 = vpack.c.b16 %v135, %v134
  %v155 = vpack.c.b16 %v137, %v136
  %v156 = vpack.c.b16 %v139, %v138
  %v157 = vpack.c.b16 %v141, %v140
  %vm173 = vcmask 998400
  %v175 = vsel %vm173, %v73, 0
  %v178 = vsel %vm173, %v75, 0
  %vm180 = vcmask 1044480
  %v182 = vsel %vm180, %v157, 0
  %184 = vmatprep.subr.bf16.mxu0 0
  %185 = vmatpush1.bf16.msra.mxu0 %v142
  %186 = vmatprep.subr.bf16.mxu0 0
  %187 = vmatpush1.bf16.msra.mxu0 %v143
  %188 = vmatprep.subr.bf16.mxu0 0
  %189 = vmatpush1.bf16.msra.mxu0 %v144
  %190 = vmatprep.subr.bf16.mxu0 0
  %191 = vmatpush1.bf16.msra.mxu0 %v145
  %192 = vmatprep.subr.bf16.mxu0 0
  %193 = vmatpush1.bf16.msra.mxu0 %v146
  %194 = vmatprep.subr.bf16.mxu0 0
  %195 = vmatpush1.bf16.msra.mxu0 %v147
  %196 = vmatprep.subr.bf16.mxu0 0
  %197 = vmatpush1.bf16.msra.mxu0 %v148
  %198 = vmatprep.subr.bf16.mxu0 0
  %199 = vmatpush1.bf16.msra.mxu0 %v149
  %200 = vmatprep.subr.bf16.mxu0 0
  %201 = vmatpush1.bf16.msra.mxu0 %v150
  %202 = vmatprep.subr.bf16.mxu0 0
  %203 = vmatpush1.bf16.msra.mxu0 %v151
  %204 = vmatprep.subr.bf16.mxu0 0
  %205 = vmatpush1.bf16.msra.mxu0 %v152
  %206 = vmatprep.subr.bf16.mxu0 0
  %207 = vmatpush1.bf16.msra.mxu0 %v153
  %208 = vmatprep.subr.bf16.mxu0 0
  %209 = vmatpush1.bf16.msra.mxu0 %v154
  %210 = vmatprep.subr.bf16.mxu0 0
  %211 = vmatpush1.bf16.msra.mxu0 %v155
  %212 = vmatprep.subr.bf16.mxu0 0
  %213 = vmatpush1.bf16.msra.mxu0 %v156
  %214 = vmatprep.subr.bf16.mxu0 0
  %215 = vmatpush1.bf16.msra.mxu0 %v182
  %216 = vmatprep.mubr.bf16.mxu0 %v175
  %217 = vmatmul.mubr.bf16.gmra.mrb[0].mxu0 %v72
  %v218 = vpop.f32.mrb[0].mxu0
  %v219 = vadd.f32 0.0, %v218
  %v220 = vpop.f32.mrb[0].mxu0
  %v221 = vpop.f32.mrb[0].mxu0
  %v222 = vadd.f32 0.0, %v221
  %v223 = vpop.f32.mrb[0].mxu0
  %224 = vmatprep.mubr.bf16.mxu0 %v178
  %225 = vmatmul.mubr.bf16.gmra.mrb[0].mxu0 %v74
  %v226 = vpop.f32.mrb[0].mxu0
  %v227 = vadd.f32 0.0, %v226
  %v228 = vpop.f32.mrb[0].mxu0
  %v229 = vpop.f32.mrb[0].mxu0
  %v230 = vadd.f32 0.0, %v229
  %v231 = vpop.f32.mrb[0].mxu0
  %232 = vdwg.mxu0
  %v233 = vld [vmem:[%s1] sm:$0xff]
  %v234 = vld [vmem:[%s1 + $0x8] sm:$0xff]
  %v235 = vld [vmem:[%s1 + $0x10] sm:$0xff]
  %v236 = vld [vmem:[%s1 + $0x18] sm:$0xff]
  %v241 = vunpack.c.l.b16 %v233
  %v242 = vunpack.c.h.b16 %v233
  %v243 = vunpack.c.l.b16 %v234
  %v244 = vunpack.c.h.b16 %v234
  %v245 = vunpack.c.l.b16 %v235
  %v246 = vunpack.c.h.b16 %v235
  %v247 = vunpack.c.l.b16 %v236
  %v248 = vunpack.c.h.b16 %v236
  %v249 = vpack.c.b16 %v243, %v241
  %v250 = vpack.c.b16 %v244, %v242
  %v251 = vpack.c.b16 %v247, %v245
  %v252 = vpack.c.b16 %v248, %v246
  %v256 = vsel %vm173, %v250, 0
  %v259 = vsel %vm173, %v252, 0
  %261 = vmatprep.subr.bf16.mxu0 0
  %262 = vmatpush1.bf16.msra.mxu0 %v142
  %263 = vmatprep.subr.bf16.mxu0 0
  %264 = vmatpush1.bf16.msra.mxu0 %v143
  %265 = vmatprep.subr.bf16.mxu0 0
  %266 = vmatpush1.bf16.msra.mxu0 %v144
  %267 = vmatprep.subr.bf16.mxu0 0
  %268 = vmatpush1.bf16.msra.mxu0 %v145
  %269 = vmatprep.subr.bf16.mxu0 0
  %270 = vmatpush1.bf16.msra.mxu0 %v146
  %271 = vmatprep.subr.bf16.mxu0 0
  %272 = vmatpush1.bf16.msra.mxu0 %v147
  %273 = vmatprep.subr.bf16.mxu0 0
  %274 = vmatpush1.bf16.msra.mxu0 %v148
  %275 = vmatprep.subr.bf16.mxu0 0
  %276 = vmatpush1.bf16.msra.mxu0 %v149
  %277 = vmatprep.subr.bf16.mxu0 0
  %278 = vmatpush1.bf16.msra.mxu0 %v150
  %279 = vmatprep.subr.bf16.mxu0 0
  %280 = vmatpush1.bf16.msra.mxu0 %v151
  %281 = vmatprep.subr.bf16.mxu0 0
  %282 = vmatpush1.bf16.msra.mxu0 %v152
  %283 = vmatprep.subr.bf16.mxu0 0
  %284 = vmatpush1.bf16.msra.mxu0 %v153
  %285 = vmatprep.subr.bf16.mxu0 0
  %286 = vmatpush1.bf16.msra.mxu0 %v154
  %287 = vmatprep.subr.bf16.mxu0 0
  %288 = vmatpush1.bf16.msra.mxu0 %v155
  %289 = vmatprep.subr.bf16.mxu0 0
  %290 = vmatpush1.bf16.msra.mxu0 %v156
  %291 = vmatprep.subr.bf16.mxu0 0
  %292 = vmatpush1.bf16.msra.mxu0 %v182
  %293 = vmatprep.mubr.bf16.mxu0 %v256
  %294 = vmatmul.mubr.bf16.gmra.mrb[0].mxu0 %v249
  %v295 = vpop.f32.mrb[0].mxu0
  %v296 = vadd.f32 0.0, %v295
  %v297 = vpop.f32.mrb[0].mxu0
  %v298 = vpop.f32.mrb[0].mxu0
  %v299 = vadd.f32 0.0, %v298
  %v300 = vpop.f32.mrb[0].mxu0
  %301 = vmatprep.mubr.bf16.mxu0 %v259
  %302 = vmatmul.mubr.bf16.gmra.mrb[0].mxu0 %v251
  %v303 = vpop.f32.mrb[0].mxu0
  %v304 = vadd.f32 0.0, %v303
  %v305 = vpop.f32.mrb[0].mxu0
  %v306 = vpop.f32.mrb[0].mxu0
  %v307 = vadd.f32 0.0, %v306
  %v308 = vpop.f32.mrb[0].mxu0
  %309 = vdwg.mxu0
  %v310 = vmax.f32 %v219, %v296
  %v311 = vmax.f32 %v222, %v299
  %v312 = vmax.f32 %v227, %v304
  %v313 = vmax.f32 %v230, %v307
  %v314 = vld [vmem:[%s2] sm:$0xff]
  %v315 = vld [vmem:[%s2 + $0x8] sm:$0xff]
  %v316 = vld [vmem:[%s2 + $0x10] sm:$0xff]
  %v317 = vld [vmem:[%s2 + $0x18] sm:$0xff]
  %v322 = vunpack.c.l.b16 %v314
  %v323 = vunpack.c.h.b16 %v314
  %v324 = vunpack.c.l.b16 %v315
  %v325 = vunpack.c.h.b16 %v315
  %v326 = vunpack.c.l.b16 %v316
  %v327 = vunpack.c.h.b16 %v316
  %v328 = vunpack.c.l.b16 %v317
  %v329 = vunpack.c.h.b16 %v317
  %v330 = vpack.c.b16 %v324, %v322
  %v331 = vpack.c.b16 %v325, %v323
  %v332 = vpack.c.b16 %v328, %v326
  %v333 = vpack.c.b16 %v329, %v327
  %v337 = vsel %vm173, %v331, 0
  %v340 = vsel %vm173, %v333, 0
  %342 = vmatprep.subr.bf16.mxu0 0
  %343 = vmatpush1.bf16.msra.mxu0 %v142
  %344 = vmatprep.subr.bf16.mxu0 0
  %345 = vmatpush1.bf16.msra.mxu0 %v143
  %346 = vmatprep.subr.bf16.mxu0 0
  %347 = vmatpush1.bf16.msra.mxu0 %v144
  %348 = vmatprep.subr.bf16.mxu0 0
  %349 = vmatpush1.bf16.msra.mxu0 %v145
  %350 = vmatprep.subr.bf16.mxu0 0
  %351 = vmatpush1.bf16.msra.mxu0 %v146
  %352 = vmatprep.subr.bf16.mxu0 0
  %353 = vmatpush1.bf16.msra.mxu0 %v147
  %354 = vmatprep.subr.bf16.mxu0 0
  %355 = vmatpush1.bf16.msra.mxu0 %v148
  %356 = vmatprep.subr.bf16.mxu0 0
  %357 = vmatpush1.bf16.msra.mxu0 %v149
  %358 = vmatprep.subr.bf16.mxu0 0
  %359 = vmatpush1.bf16.msra.mxu0 %v150
  %360 = vmatprep.subr.bf16.mxu0 0
  %361 = vmatpush1.bf16.msra.mxu0 %v151
  %362 = vmatprep.subr.bf16.mxu0 0
  %363 = vmatpush1.bf16.msra.mxu0 %v152
  %364 = vmatprep.subr.bf16.mxu0 0
  %365 = vmatpush1.bf16.msra.mxu0 %v153
  %366 = vmatprep.subr.bf16.mxu0 0
  %367 = vmatpush1.bf16.msra.mxu0 %v154
  %368 = vmatprep.subr.bf16.mxu0 0
  %369 = vmatpush1.bf16.msra.mxu0 %v155
  %370 = vmatprep.subr.bf16.mxu0 0
  %371 = vmatpush1.bf16.msra.mxu0 %v156
  %372 = vmatprep.subr.bf16.mxu0 0
  %373 = vmatpush1.bf16.msra.mxu0 %v182
  %374 = vmatprep.mubr.bf16.mxu0 %v337
  %375 = vmatmul.mubr.bf16.gmra.mrb[0].mxu0 %v330
  %v376 = vpop.f32.mrb[0].mxu0
  %v377 = vadd.f32 0.0, %v376
  %v378 = vpop.f32.mrb[0].mxu0
  %v379 = vpop.f32.mrb[0].mxu0
  %v380 = vadd.f32 0.0, %v379
  %v381 = vpop.f32.mrb[0].mxu0
  %382 = vmatprep.mubr.bf16.mxu0 %v340
  %383 = vmatmul.mubr.bf16.gmra.mrb[0].mxu0 %v332
  %v384 = vpop.f32.mrb[0].mxu0
  %v385 = vadd.f32 0.0, %v384
  %v386 = vpop.f32.mrb[0].mxu0
  %v387 = vpop.f32.mrb[0].mxu0
  %v388 = vadd.f32 0.0, %v387
  %v389 = vpop.f32.mrb[0].mxu0
  %390 = vdwg.mxu0
  %v391 = vmax.f32 %v310, %v377
  %v392 = vmax.f32 %v311, %v380
  %v393 = vmax.f32 %v312, %v385
  %v394 = vmax.f32 %v313, %v388
  %v395 = vld [vmem:[%s3] sm:$0xff]
  %v396 = vld [vmem:[%s3 + $0x8] sm:$0xff]
  %v397 = vld [vmem:[%s3 + $0x10] sm:$0xff]
  %v398 = vld [vmem:[%s3 + $0x18] sm:$0xff]
  %v403 = vunpack.c.l.b16 %v395
  %v404 = vunpack.c.h.b16 %v395
  %v405 = vunpack.c.l.b16 %v396
  %v406 = vunpack.c.h.b16 %v396
  %v407 = vunpack.c.l.b16 %v397
  %v408 = vunpack.c.h.b16 %v397
  %v409 = vunpack.c.l.b16 %v398
  %v410 = vunpack.c.h.b16 %v398
  %v411 = vpack.c.b16 %v405, %v403
  %v412 = vpack.c.b16 %v406, %v404
  %v413 = vpack.c.b16 %v409, %v407
  %v414 = vpack.c.b16 %v410, %v408
  %v418 = vsel %vm173, %v412, 0
  %v421 = vsel %vm173, %v414, 0
  %423 = vmatprep.subr.bf16.mxu0 0
  %424 = vmatpush1.bf16.msra.mxu0 %v142
  %425 = vmatprep.subr.bf16.mxu0 0
  %426 = vmatpush1.bf16.msra.mxu0 %v143
  %427 = vmatprep.subr.bf16.mxu0 0
  %428 = vmatpush1.bf16.msra.mxu0 %v144
  %429 = vmatprep.subr.bf16.mxu0 0
  %430 = vmatpush1.bf16.msra.mxu0 %v145
  %431 = vmatprep.subr.bf16.mxu0 0
  %432 = vmatpush1.bf16.msra.mxu0 %v146
  %433 = vmatprep.subr.bf16.mxu0 0
  %434 = vmatpush1.bf16.msra.mxu0 %v147
  %435 = vmatprep.subr.bf16.mxu0 0
  %436 = vmatpush1.bf16.msra.mxu0 %v148
  %437 = vmatprep.subr.bf16.mxu0 0
  %438 = vmatpush1.bf16.msra.mxu0 %v149
  %439 = vmatprep.subr.bf16.mxu0 0
  %440 = vmatpush1.bf16.msra.mxu0 %v150
  %441 = vmatprep.subr.bf16.mxu0 0
  %442 = vmatpush1.bf16.msra.mxu0 %v151
  %443 = vmatprep.subr.bf16.mxu0 0
  %444 = vmatpush1.bf16.msra.mxu0 %v152
  %445 = vmatprep.subr.bf16.mxu0 0
  %446 = vmatpush1.bf16.msra.mxu0 %v153
  %447 = vmatprep.subr.bf16.mxu0 0
  %448 = vmatpush1.bf16.msra.mxu0 %v154
  %449 = vmatprep.subr.bf16.mxu0 0
  %450 = vmatpush1.bf16.msra.mxu0 %v155
  %451 = vmatprep.subr.bf16.mxu0 0
  %452 = vmatpush1.bf16.msra.mxu0 %v156
  %453 = vmatprep.subr.bf16.mxu0 0
  %454 = vmatpush1.bf16.msra.mxu0 %v182
  %455 = vmatprep.mubr.bf16.mxu0 %v418
  %456 = vmatmul.mubr.bf16.gmra.mrb[0].mxu0 %v411
  %v457 = vpop.f32.mrb[0].mxu0
  %v458 = vadd.f32 0.0, %v457
  %v459 = vpop.f32.mrb[0].mxu0
  %v460 = vpop.f32.mrb[0].mxu0
  %v461 = vadd.f32 0.0, %v460
  %v462 = vpop.f32.mrb[0].mxu0
  %463 = vmatprep.mubr.bf16.mxu0 %v421
  %464 = vmatmul.mubr.bf16.gmra.mrb[0].mxu0 %v413
  %v465 = vpop.f32.mrb[0].mxu0
  %v466 = vadd.f32 0.0, %v465
  %v467 = vpop.f32.mrb[0].mxu0
  %v468 = vpop.f32.mrb[0].mxu0
  %v469 = vadd.f32 0.0, %v468
  %v470 = vpop.f32.mrb[0].mxu0
  %471 = vdwg.mxu0
  %v472 = vmax.f32 %v391, %v458
  %v473 = vmax.f32 %v392, %v461
  %v474 = vmax.f32 %v393, %v466
  %v475 = vmax.f32 %v394, %v469
  %v476 = vld [vmem:[%s5] sm:$0x1]
  %v478 = vlaneseq
  %v479 = vshrl.u32 %v478, 7
  %v480 = vsub.s32 0, %v479
  %v481 = vrot.slane %v476, %v480
  %v483 = vadd.f32 %v472, %v481
  %v484 = vadd.f32 %v473, %v481
  %v485 = vadd.f32 %v474, %v481
  %v486 = vadd.f32 %v475, %v481
  %v487 = vmax.f32 %v483, 0.0
  %v488 = vmax.f32 %v484, 0.0
  %v489 = vmax.f32 %v485, 0.0
  %v490 = vmax.f32 %v486, 0.0
  %v491 = vpack.c.bf16 %v488, %v487
  %v492 = vpack.c.bf16 %v490, %v489
  %v495 = vunpack.c.l.b16 %v491
  %v496 = vunpack.c.h.b16 %v491
  %v497 = vunpack.c.l.b16 %v492
  %v498 = vunpack.c.h.b16 %v492
  %v499 = vpack.c.b16 %v495, %v495
  %v500 = vpack.c.b16 %v496, %v496
  %v501 = vpack.c.b16 %v497, %v497
  %v502 = vpack.c.b16 %v498, %v498
  %vm507 = vcmask 158720
  %508 = vst.msk [vmem:[%s6] sm:$0xf] %vm507, %v499
  %509 = vst.msk [vmem:[%s6 + $0x4] sm:$0xf] %vm507, %v500
  %510 = vst.msk [vmem:[%s6 + $0x8] sm:$0xf] %vm507, %v501
  %511 = vst.msk [vmem:[%s6 + $0xc] sm:$0xf] %vm507, %v502
  // Predicated region
  $region26: #{convneta_forward.4} parent=0 // pred_check
    _
  $region27: #{convneta_forward.4} parent=0 // pred_check_branch
    %513 = sbr.rel (0) target = $region29
  $region28: #{convneta_forward.4} parent=0 // pred_region
    _
  $region29: #{convneta_forward.4} parent=0 // pred_fallthru
    _
  // Predicated region
  $region30: #{convneta_forward.4} parent=0 // pred_check
    _
  $region31: #{convneta_forward.4} parent=0 // pred_check_branch
    %515 = sbr.rel (0) target = $region33
  $region32: #{convneta_forward.4} parent=0 // pred_region
    _
  $region33: #{convneta_forward.4} parent=0 // pred_fallthru
    _

// kernel: convneta_forward.5
$region0: #{convneta_forward.5}
  #allocation0 [shape = 'u32[]', space=smem, size = 0x4, offset = 0x4, fixed_abs, tag = 'smem constant byte address 0x4 - core index']
  #allocation1 [shape = 'u32[144,128]{1,0:T(1,128)}', space=vmem, size = 0x12000, scoped, tag = 'internal scratch']
  %s0 = inlined_call_operand.vmem [shape: bf16[8,320], index: 0, kind: input, shape index: {}]
  %s1 = inlined_call_operand.vmem [shape: bf16[320,50], index: 1, kind: input, shape index: {}]
  %s2 = inlined_call_operand.vmem [shape: f32[1,50], index: 2, kind: input, shape index: {}]
  %s3 = inlined_call_operand.vmem [shape: bf16[50,10], index: 3, kind: input, shape index: {}]
  %s4 = inlined_call_operand.vmem [shape: f32[1,10], index: 4, kind: input, shape index: {}]
  %s5 = inlined_call_operand.vmem [shape: f32[8,10], index: 5, kind: output, shape index: {}]
  %s6 = sld [smem:[#allocation0]]
  $region30: #{convneta_forward.5} parent=0
    _
  %s8 = ssub.s32 1, %s6
  %s9 = scalar_select 0, %s8, %s6
  // Predicated region
  $region2: #{convneta_forward.5} parent=0 // pred_check
    _
  $region3: #{convneta_forward.5} parent=0 // pred_check_branch
    %11 = sbr.rel (0) target = $region5
  $region4: #{convneta_forward.5} parent=0 // pred_region
    _
  $region5: #{convneta_forward.5} parent=0 // pred_fallthru
    _
  // Predicated region
  $region6: #{convneta_forward.5} parent=0 // pred_check
    _
  $region7: #{convneta_forward.5} parent=0 // pred_check_branch
    %13 = sbr.rel (0) target = $region9
  $region8: #{convneta_forward.5} parent=0 // pred_region
    _
  $region9: #{convneta_forward.5} parent=0 // pred_fallthru
    _
  // Predicated region
  $region10: #{convneta_forward.5} parent=0 // pred_check
    _
  $region11: #{convneta_forward.5} parent=0 // pred_check_branch
    %15 = sbr.rel (0) target = $region13
  $region12: #{convneta_forward.5} parent=0 // pred_region
    _
  $region13: #{convneta_forward.5} parent=0 // pred_fallthru
    _
  // Predicated region
  $region14: #{convneta_forward.5} parent=0 // pred_check
    _
  $region15: #{convneta_forward.5} parent=0 // pred_check_branch
    %17 = sbr.rel (0) target = $region17
  $region16: #{convneta_forward.5} parent=0 // pred_region
    _
  $region17: #{convneta_forward.5} parent=0 // pred_fallthru
    _
  // Predicated region
  $region18: #{convneta_forward.5} parent=0 // pred_check
    _
  $region19: #{convneta_forward.5} parent=0 // pred_check_branch
    %19 = sbr.rel (0) target = $region21
  $region20: #{convneta_forward.5} parent=0 // pred_region
    _
  $region21: #{convneta_forward.5} parent=0 // pred_fallthru
    _
  %v21 = vld [vmem:[%s0] sm:$0xff]
  %v22 = vld [vmem:[%s0 + $0x8] sm:$0xf]
  %v23 = vld [vmem:[%s1] sm:$0xf]
  %v24 = vld [vmem:[%s1 + $0x4] sm:$0xf]
  %v25 = vld [vmem:[%s1 + $0x8] sm:$0xf]
  %v26 = vld [vmem:[%s1 + $0xc] sm:$0xf]
  %v27 = vld [vmem:[%s1 + $0x10] sm:$0xf]
  %v28 = vld [vmem:[%s1 + $0x14] sm:$0xf]
  %v29 = vld [vmem:[%s1 + $0x18] sm:$0xf]
  %v30 = vld [vmem:[%s1 + $0x1c] sm:$0xf]
  %v31 = vld [vmem:[%s1 + $0x20] sm:$0xf]
  %v32 = vld [vmem:[%s1 + $0x24] sm:$0xf]
  %v33 = vld [vmem:[%s1 + $0x28] sm:$0xf]
  %v34 = vld [vmem:[%s1 + $0x2c] sm:$0xf]
  %v35 = vld [vmem:[%s1 + $0x30] sm:$0xf]
  %v36 = vld [vmem:[%s1 + $0x34] sm:$0xf]
  %v37 = vld [vmem:[%s1 + $0x38] sm:$0xf]
  %v38 = vld [vmem:[%s1 + $0x3c] sm:$0xf]
  %v39 = vld [vmem:[%s1 + $0x40] sm:$0xf]
  %v40 = vld [vmem:[%s1 + $0x44] sm:$0xf]
  %v41 = vld [vmem:[%s1 + $0x48] sm:$0xf]
  %v42 = vld [vmem:[%s1 + $0x4c] sm:$0xf]
  %v43 = vld [vmem:[%s1 + $0x50] sm:$0xf]
  %v44 = vld [vmem:[%s1 + $0x54] sm:$0xf]
  %v45 = vld [vmem:[%s1 + $0x58] sm:$0xf]
  %v46 = vld [vmem:[%s1 + $0x5c] sm:$0xf]
  %v47 = vld [vmem:[%s1 + $0x60] sm:$0xf]
  %v48 = vld [vmem:[%s1 + $0x64] sm:$0xf]
  %v49 = vld [vmem:[%s1 + $0x68] sm:$0xf]
  %v50 = vld [vmem:[%s1 + $0x6c] sm:$0xf]
  %v51 = vld [vmem:[%s1 + $0x70] sm:$0xf]
  %v52 = vld [vmem:[%s1 + $0x74] sm:$0xf]
  %v53 = vld [vmem:[%s1 + $0x78] sm:$0xf]
  %v54 = vld [vmem:[%s1 + $0x7c] sm:$0xf]
  %v55 = vld [vmem:[%s1 + $0x80] sm:$0xf]
  %v56 = vld [vmem:[%s1 + $0x84] sm:$0xf]
  %v57 = vld [vmem:[%s1 + $0x88] sm:$0xf]
  %v58 = vld [vmem:[%s1 + $0x8c] sm:$0xf]
  %v59 = vld [vmem:[%s1 + $0x90] sm:$0xf]
  %v60 = vld [vmem:[%s1 + $0x94] sm:$0xf]
  %v61 = vld [vmem:[%s1 + $0x98] sm:$0xf]
  %v62 = vld [vmem:[%s1 + $0x9c] sm:$0xf]
  %v63 = vld [vmem:[%s2] sm:$0x1]
  %v65 = vlaneseq
  %v66 = vshrl.u32 %v65, 7
  %v67 = vsub.s32 0, %v66
  %v68 = vrot.slane %v63, %v67
  %v72 = vunpack.c.l.b16 %v21
  %v73 = vunpack.c.h.b16 %v21
  %v74 = vunpack.c.l.b16 %v22
  %v75 = vpack.c.b16 %v72, %v72
  %v76 = vpack.c.b16 %v73, %v73
  %v77 = vpack.c.b16 %v74, %v74
  %v120 = vunpack.c.l.b16 %v23
  %v121 = vunpack.c.l.b16 %v24
  %v122 = vunpack.c.l.b16 %v25
  %v123 = vunpack.c.l.b16 %v26
  %v124 = vunpack.c.l.b16 %v27
  %v125 = vunpack.c.l.b16 %v28
  %v126 = vunpack.c.l.b16 %v29
  %v127 = vunpack.c.l.b16 %v30
  %v128 = vunpack.c.l.b16 %v31
  %v129 = vunpack.c.l.b16 %v32
  %v130 = vunpack.c.l.b16 %v33
  %v131 = vunpack.c.l.b16 %v34
  %v132 = vunpack.c.l.b16 %v35
  %v133 = vunpack.c.l.b16 %v36
  %v134 = vunpack.c.l.b16 %v37
  %v135 = vunpack.c.l.b16 %v38
  %v136 = vunpack.c.l.b16 %v39
  %v137 = vunpack.c.l.b16 %v40
  %v138 = vunpack.c.l.b16 %v41
  %v139 = vunpack.c.l.b16 %v42
  %v140 = vunpack.c.l.b16 %v43
  %v141 = vunpack.c.l.b16 %v44
  %v142 = vunpack.c.l.b16 %v45
  %v143 = vunpack.c.l.b16 %v46
  %v144 = vunpack.c.l.b16 %v47
  %v145 = vunpack.c.l.b16 %v48
  %v146 = vunpack.c.l.b16 %v49
  %v147 = vunpack.c.l.b16 %v50
  %v148 = vunpack.c.l.b16 %v51
  %v149 = vunpack.c.l.b16 %v52
  %v150 = vunpack.c.l.b16 %v53
  %v151 = vunpack.c.l.b16 %v54
  %v152 = vunpack.c.l.b16 %v55
  %v153 = vunpack.c.l.b16 %v56
  %v154 = vunpack.c.l.b16 %v57
  %v155 = vunpack.c.l.b16 %v58
  %v156 = vunpack.c.l.b16 %v59
  %v157 = vunpack.c.l.b16 %v60
  %v158 = vunpack.c.l.b16 %v61
  %v159 = vunpack.c.l.b16 %v62
  %v160 = vpack.c.b16 %v121, %v120
  %v161 = vpack.c.b16 %v123, %v122
  %v162 = vpack.c.b16 %v125, %v124
  %v163 = vpack.c.b16 %v127, %v126
  %v164 = vpack.c.b16 %v129, %v128
  %v165 = vpack.c.b16 %v131, %v130
  %v166 = vpack.c.b16 %v133, %v132
  %v167 = vpack.c.b16 %v135, %v134
  %v168 = vpack.c.b16 %v137, %v136
  %v169 = vpack.c.b16 %v139, %v138
  %v170 = vpack.c.b16 %v141, %v140
  %v171 = vpack.c.b16 %v143, %v142
  %v172 = vpack.c.b16 %v145, %v144
  %v173 = vpack.c.b16 %v147, %v146
  %v174 = vpack.c.b16 %v149, %v148
  %v175 = vpack.c.b16 %v151, %v150
  %v176 = vpack.c.b16 %v153, %v152
  %v177 = vpack.c.b16 %v155, %v154
  %v178 = vpack.c.b16 %v157, %v156
  %v179 = vpack.c.b16 %v159, %v158
  %vm200 = vcmask 523264
  %v202 = vsel %vm200, %v77, 0
  %204 = vmatprep.subr.bf16.mxu0 0
  %205 = vmatpush1.bf16.msra.mxu0 %v160
  %206 = vmatprep.subr.bf16.mxu0 0
  %207 = vmatpush1.bf16.msra.mxu0 %v161
  %208 = vmatprep.subr.bf16.mxu0 0
  %209 = vmatpush1.bf16.msra.mxu0 %v162
  %210 = vmatprep.subr.bf16.mxu0 0
  %211 = vmatpush1.bf16.msra.mxu0 %v163
  %212 = vmatprep.subr.bf16.mxu0 0
  %213 = vmatpush1.bf16.msra.mxu0 %v164
  %214 = vmatprep.subr.bf16.mxu0 0
  %215 = vmatpush1.bf16.msra.mxu0 %v165
  %216 = vmatprep.subr.bf16.mxu0 0
  %217 = vmatpush1.bf16.msra.mxu0 %v166
  %218 = vmatprep.subr.bf16.mxu0 0
  %219 = vmatpush1.bf16.msra.mxu0 %v167
  %220 = vmatprep.subr.bf16.mxu0 0
  %221 = vmatpush1.bf16.msra.mxu0 %v168
  %222 = vmatprep.subr.bf16.mxu0 0
  %223 = vmatpush1.bf16.msra.mxu0 %v169
  %224 = vmatprep.subr.bf16.mxu0 0
  %225 = vmatpush1.bf16.msra.mxu0 %v170
  %226 = vmatprep.subr.bf16.mxu0 0
  %227 = vmatpush1.bf16.msra.mxu0 %v171
  %228 = vmatprep.subr.bf16.mxu0 0
  %229 = vmatpush1.bf16.msra.mxu0 %v172
  %230 = vmatprep.subr.bf16.mxu0 0
  %231 = vmatpush1.bf16.msra.mxu0 %v173
  %232 = vmatprep.subr.bf16.mxu0 0
  %233 = vmatpush1.bf16.msra.mxu0 %v174
  %234 = vmatprep.subr.bf16.mxu0 0
  %235 = vmatpush1.bf16.msra.mxu0 %v175
  %236 = vmatprep.mubr.bf16.mxu0 %v76
  %237 = vmatmul.mubr.bf16.gmra.mrb[0].mxu0 %v75
  %v238 = vpop.f32.mrb[0].mxu0
  %v239 = vadd.f32 %v68, %v238
  %v240 = vpop.f32.mrb[0].mxu0
  %v241 = vpop.f32.mrb[0].mxu0
  %v242 = vpop.f32.mrb[0].mxu0
  %243 = vdwg.mxu0
  %244 = vmatprep.subr.bf16.mxu0 0
  %245 = vmatpush1.bf16.msra.mxu0 %v176
  %246 = vmatprep.subr.bf16.mxu0 0
  %247 = vmatpush1.bf16.msra.mxu0 %v177
  %248 = vmatprep.subr.bf16.mxu0 0
  %249 = vmatpush1.bf16.msra.mxu0 %v178
  %250 = vmatprep.subr.bf16.mxu0 0
  %251 = vmatpush1.bf16.msra.mxu0 %v179
  %252 = vmatprep.subr.bf16.mxu0 0
  %253 = vmatpush1.bf16.msra.mxu0 0
  %254 = vmatprep.subr.bf16.mxu0 0
  %255 = vmatpush1.bf16.msra.mxu0 0
  %256 = vmatprep.subr.bf16.mxu0 0
  %257 = vmatpush1.bf16.msra.mxu0 0
  %258 = vmatprep.subr.bf16.mxu0 0
  %259 = vmatpush1.bf16.msra.mxu0 0
  %260 = vmatprep.subr.bf16.mxu0 0
  %261 = vmatpush1.bf16.msra.mxu0 0
  %262 = vmatprep.subr.bf16.mxu0 0
  %263 = vmatpush1.bf16.msra.mxu0 0
  %264 = vmatprep.subr.bf16.mxu0 0
  %265 = vmatpush1.bf16.msra.mxu0 0
  %266 = vmatprep.subr.bf16.mxu0 0
  %267 = vmatpush1.bf16.msra.mxu0 0
  %268 = vmatprep.subr.bf16.mxu0 0
  %269 = vmatpush1.bf16.msra.mxu0 0
  %270 = vmatprep.subr.bf16.mxu0 0
  %271 = vmatpush1.bf16.msra.mxu0 0
  %272 = vmatprep.subr.bf16.mxu0 0
  %273 = vmatpush1.bf16.msra.mxu0 0
  %274 = vmatprep.subr.bf16.mxu0 0
  %275 = vmatpush1.bf16.msra.mxu0 0
  %276 = vmatprep.mubr.bf16.mxu0 0
  %277 = vmatmul.mubr.bf16.gmra.mrb[0].mxu0 %v202
  %v278 = vpop.f32.mrb[0].mxu0
  %v279 = vadd.f32 %v239, %v278
  %v280 = vpop.f32.mrb[0].mxu0
  %v281 = vpop.f32.mrb[0].mxu0
  %v282 = vpop.f32.mrb[0].mxu0
  %283 = vdwg.mxu0
  %v284 = vmax.f32 %v279, 0.0
  %v285 = vpack.c.bf16 %v284, %v284
  %v286 = vld [vmem:[%s3] sm:$0xf]
  %v287 = vld [vmem:[%s3 + $0x4] sm:$0xf]
  %v288 = vld [vmem:[%s3 + $0x8] sm:$0xf]
  %v289 = vld [vmem:[%s3 + $0xc] sm:$0xf]
  %v290 = vld [vmem:[%s3 + $0x10] sm:$0xf]
  %v291 = vld [vmem:[%s3 + $0x14] sm:$0xf]
  %v292 = vld [vmem:[%s3 + $0x18] sm:$0x1]
  %v293 = vld [vmem:[%s4] sm:$0x1]
  %v295 = vlaneseq
  %v296 = vshrl.u32 %v295, 7
  %v297 = vsub.s32 0, %v296
  %v298 = vrot.slane %v293, %v297
  %v307 = vunpack.c.l.b16 %v286
  %v308 = vunpack.c.l.b16 %v287
  %v309 = vunpack.c.l.b16 %v288
  %v310 = vunpack.c.l.b16 %v289
  %v311 = vunpack.c.l.b16 %v290
  %v312 = vunpack.c.l.b16 %v291
  %v313 = vunpack.c.l.b16 %v292
  %v314 = vpack.c.b16 %v308, %v307
  %v315 = vpack.c.b16 %v310, %v309
  %v316 = vpack.c.b16 %v312, %v311
  %v317 = vpack.c.b16 %v313, %v313
  %vm321 = vcmask 408576
  %v323 = vsel %vm321, %v285, 0
  %vm325 = vcmask 1040384
  %v327 = vsel %vm325, %v317, 0
  %329 = vmatprep.subr.bf16.mxu0 0
  %330 = vmatpush1.bf16.msra.mxu0 %v314
  %331 = vmatprep.subr.bf16.mxu0 0
  %332 = vmatpush1.bf16.msra.mxu0 %v315
  %333 = vmatprep.subr.bf16.mxu0 0
  %334 = vmatpush1.bf16.msra.mxu0 %v316
  %335 = vmatprep.subr.bf16.mxu0 0
  %336 = vmatpush1.bf16.msra.mxu0 %v327
  %337 = vmatprep.subr.bf16.mxu0 0
  %338 = vmatpush1.bf16.msra.mxu0 0
  %339 = vmatprep.subr.bf16.mxu0 0
  %340 = vmatpush1.bf16.msra.mxu0 0
  %341 = vmatprep.subr.bf16.mxu0 0
  %342 = vmatpush1.bf16.msra.mxu0 0
  %343 = vmatprep.subr.bf16.mxu0 0
  %344 = vmatpush1.bf16.msra.mxu0 0
  %345 = vmatprep.subr.bf16.mxu0 0
  %346 = vmatpush1.bf16.msra.mxu0 0
  %347 = vmatprep.subr.bf16.mxu0 0
  %348 = vmatpush1.bf16.msra.mxu0 0
  %349 = vmatprep.subr.bf16.mxu0 0
  %350 = vmatpush1.bf16.msra.mxu0 0
  %351 = vmatprep.subr.bf16.mxu0 0
  %352 = vmatpush1.bf16.msra.mxu0 0
  %353 = vmatprep.subr.bf16.mxu0 0
  %354 = vmatpush1.bf16.msra.mxu0 0
  %355 = vmatprep.subr.bf16.mxu0 0
  %356 = vmatpush1.bf16.msra.mxu0 0
  %357 = vmatprep.subr.bf16.mxu0 0
  %358 = vmatpush1.bf16.msra.mxu0 0
  %359 = vmatprep.subr.bf16.mxu0 0
  %360 = vmatpush1.bf16.msra.mxu0 0
  %361 = vmatprep.mubr.bf16.mxu0 0
  %362 = vmatmul.mubr.bf16.gmra.mrb[0].mxu0 %v323
  %v363 = vpop.f32.mrb[0].mxu0
  %v364 = vadd.f32 %v298, %v363
  %v365 = vpop.f32.mrb[0].mxu0
  %v366 = vpop.f32.mrb[0].mxu0
  %v367 = vpop.f32.mrb[0].mxu0
  %368 = vdwg.mxu0
  %vm369 = vcmask 80896
  %370 = vst.msk [vmem:[%s5] sm:$0xff] %vm369, %v364
  // Predicated region
  $region22: #{convneta_forward.5} parent=0 // pred_check
    _
  $region23: #{convneta_forward.5} parent=0 // pred_check_branch
    %372 = sbr.rel (0) target = $region25
  $region24: #{convneta_forward.5} parent=0 // pred_region
    _
  $region25: #{convneta_forward.5} parent=0 // pred_fallthru
    _
  // Predicated region
  $region26: #{convneta_forward.5} parent=0 // pred_check
    _
  $region27: #{convneta_forward.5} parent=0 // pred_check_branch
    %374 = sbr.rel (0) target = $region29
  $region28: #{convneta_forward.5} parent=0 // pred_region
    _
  $region29: #{convneta_forward.5} parent=0 // pred_fallthru
    _

</llo_original>
